<compile_context>
chip_gen: v5e
topology: v5e:2x2
jax: 0.10.0
libtpu: 0.0.40
codegen_flags: <defaults>
</compile_context>

<pallas_src>
import functools

import jax
import jax.numpy as jnp
import numpy as np
from jax.experimental import pallas as pl
from jax.experimental.pallas import tpu as pltpu


# ----------------------------------------------------------------------------- helpers
def _mlp_sigmoid(x, w1, b1, w2, b2, w3, b3):
    """3x Linear with ReLU, ReLU, Sigmoid. x: [B, H] f32; weights are VMEM refs."""
    x = jnp.maximum(jnp.dot(x, w1[...], preferred_element_type=jnp.float32) + b1[...], 0.0)
    x = jnp.maximum(jnp.dot(x, w2[...], preferred_element_type=jnp.float32) + b2[...], 0.0)
    x = jnp.dot(x, w3[...], preferred_element_type=jnp.float32) + b3[...]
    return jax.nn.sigmoid(x)


# --------------------------------------------------------------------- kernel A: reduce
def _reduce_and_gate_kernel(bid_ref, hV_ref,
                            vw1, vb1, vw2, vb2, vw3, vb3,
                            ew1, eb1, ew2, eb2, ew3, eb3,
                            gV_ref, gE_ref, acc_ref, cnt_ref, *, num_graphs):
    """Segment-sum h_V into a resident [B, H] accumulator; on the last grid step
    compute node gate g_V = sig(V_MLP_g(c_V)) and edge gate g_E = sig(E_MLP_g(c_V*g_V))."""
    i = pl.program_id(0)

    @pl.when(i == 0)
    def _init():
        acc_ref[...] = jnp.zeros_like(acc_ref)
        cnt_ref[...] = jnp.zeros_like(cnt_ref)

    B = num_graphs
    tn = hV_ref.shape[0]

    bid = bid_ref[...]                                               # [1, tn] int32 (lane-dense)
    graph_iota = jax.lax.broadcasted_iota(jnp.int32, (B, tn), 0)
    onehot = (bid == graph_iota).astype(jnp.float32)                 # [B, tn]; padded rows (bid=-1) -> 0

    x = hV_ref[...].astype(jnp.float32)                              # [tn, H]
    # K = tn (large) contraction on the MXU; accumulate in f32 scratch.
    acc_ref[...] += jnp.dot(onehot, x, preferred_element_type=jnp.float32)
    cnt_ref[...] += jnp.sum(onehot, axis=1, keepdims=True)           # [B, 1]

    @pl.when(i == pl.num_programs(0) - 1)
    def _finalize():
        c_V = acc_ref[...] / jnp.maximum(cnt_ref[...], 1.0)          # scatter_mean (count clamped to 1)
        g_V = _mlp_sigmoid(c_V, vw1, vb1, vw2, vb2, vw3, vb3)        # [B, H]
        # scatter_mean(h_V * g_V[bid]) == c_V * g_V  (same gate for every node of a graph)
        c_V2 = c_V * g_V
        g_E = _mlp_sigmoid(c_V2, ew1, eb1, ew2, eb2, ew3, eb3)       # [B, H]
        gV_ref[...] = g_V.astype(gV_ref.dtype)
        gE_ref[...] = g_E.astype(gE_ref.dtype)


# ---------------------------------------------------------------------- kernel B: apply
def _apply_gate_kernel(bid_ref, gate_ref, h_ref, out_ref, *, num_graphs):
    """out[n, :] = h[n, :] * gate[bid[n], :] for one row block."""
    B = num_graphs
    tn = h_ref.shape[0]

    bid = bid_ref[...]                                               # [1, tn]
    graph_iota = jax.lax.broadcasted_iota(jnp.int32, (B, tn), 0)
    onehot = (bid == graph_iota).astype(jnp.float32)                 # [B, tn]
    gate = gate_ref[...].astype(jnp.float32)                         # [B, H]

    # One-hot gather on the MXU: gathered[n, h] = sum_b onehot[b, n] * gate[b, h]
    gathered = jax.lax.dot_general(onehot, gate, (((0,), (0,)), ((), ())),
                                   preferred_element_type=jnp.float32)  # [tn, H]
    out_ref[...] = (h_ref[...].astype(jnp.float32) * gathered).astype(out_ref.dtype)


# --------------------------------------------------------------------------- wrapper
def _pad_rows(x, m):
    pad = (-x.shape[0]) % m
    if pad:
        x = jnp.pad(x, ((0, pad), (0, 0)))
    return x


def _pad_ids(ids, m):
    pad = (-ids.shape[0]) % m
    if pad:
        ids = jnp.pad(ids, (0, pad), constant_values=-1)   # -1 never matches a graph id
    return ids


@functools.partial(jax.jit, static_argnums=(5, 6))
def context_forward(h_V, h_E, edge_idx, batch_id, params, num_graphs, block_rows):
    N, H = h_V.shape
    E = h_E.shape[0]
    B = num_graphs
    assert block_rows % 128 == 0, "block_rows must be a multiple of 128 (lane tiling)"
    assert H % 128 == 0, "hidden dim must be a multiple of 128 (lane-dense stores)"

    batch_id = batch_id.astype(jnp.int32)
    edge_batch = batch_id[edge_idx[0]]                     # plain-JAX glue gather (tiny int op)

    # Pad rows up to a multiple of the block size (zeros + out-of-range ids).
    hV_p = _pad_rows(h_V, block_rows)
    hE_p = _pad_rows(h_E, block_rows)
    bidN = _pad_ids(batch_id, block_rows).reshape(1, -1)    # [1, Np] lane-dense ids
    bidE = _pad_ids(edge_batch, block_rows).reshape(1, -1)  # [1, Ep]
    Np, Ep = hV_p.shape[0], hE_p.shape[0]

    vmem_limit = 32 * 1024 * 1024  # safe on v5e/v6e/v7x; per-block footprint is ~MiB scale
    cp_reduce = pltpu.CompilerParams(dimension_semantics=("arbitrary",),
                                     vmem_limit_bytes=vmem_limit)
    cp_apply = pltpu.CompilerParams(dimension_semantics=("parallel",),
                                    vmem_limit_bytes=vmem_limit)

    w_spec = pl.BlockSpec((H, H), lambda i: (0, 0))         # constant index -> stays resident
    b_spec = pl.BlockSpec((1, H), lambda i: (0, 0))

    # ---- phase 1: segment-mean + per-graph gates ([B, H]) ----
    g_V, g_E = pl.pallas_call(
        functools.partial(_reduce_and_gate_kernel, num_graphs=B),
        grid=(Np // block_rows,),
        in_specs=[
            pl.BlockSpec((1, block_rows), lambda i: (0, i)),     # batch ids, lane-dense
            pl.BlockSpec((block_rows, H), lambda i: (i, 0)),     # h_V row block
            w_spec, b_spec, w_spec, b_spec, w_spec, b_spec,      # V_MLP_g
            w_spec, b_spec, w_spec, b_spec, w_spec, b_spec,      # E_MLP_g
        ],
        out_specs=(pl.BlockSpec((B, H), lambda i: (0, 0)),
                   pl.BlockSpec((B, H), lambda i: (0, 0))),
        out_shape=(jax.ShapeDtypeStruct((B, H), jnp.float32),
                   jax.ShapeDtypeStruct((B, H), jnp.float32)),
        scratch_shapes=[pltpu.VMEM((B, H), jnp.float32),         # c_V sum accumulator
                        pltpu.VMEM((B, 1), jnp.float32)],        # per-graph counts
        compiler_params=cp_reduce,
    )(bidN, hV_p,
      params["vw1"], params["vb1"], params["vw2"], params["vb2"],
      params["vw3"], params["vb3"],
      params["ew1"], params["eb1"], params["ew2"], params["eb2"],
      params["ew3"], params["eb3"])

    # ---- phase 2: stream rows, gather gate per row, multiply ----
    def apply_gate(bid2d, gate, h_p):
        rows = h_p.shape[0]
        return pl.pallas_call(
            functools.partial(_apply_gate_kernel, num_graphs=B),
            grid=(rows // block_rows,),
            in_specs=[
                pl.BlockSpec((1, block_rows), lambda i: (0, i)),
                pl.BlockSpec((B, H), lambda i: (0, 0)),
                pl.BlockSpec((block_rows, H), lambda i: (i, 0)),
            ],
            out_specs=pl.BlockSpec((block_rows, H), lambda i: (i, 0)),
            out_shape=jax.ShapeDtypeStruct((rows, H), h_p.dtype),
            input_output_aliases={2: 0},                         # h -> h_out (in-place stream)
            compiler_params=cp_apply,
        )(bid2d, gate, h_p)

    hV_out = apply_gate(bidN, g_V, hV_p)[:N]
    hE_out = apply_gate(bidE, g_E, hE_p)[:E]
    return hV_out, hE_out


# --------------------------------------------------------------------------- reference
def reference_forward(h_V, h_E, edge_idx, batch_id, params, num_graphs):
    """Pure-JAX reference matching the PyTorch forward (including the 2nd scatter_mean)."""
    def mlp_sig(x, w1, b1, w2, b2, w3, b3):
        x = jax.nn.relu(x @ w1 + b1)
        x = jax.nn.relu(x @ w2 + b2)
        return jax.nn.sigmoid(x @ w3 + b3)

    def scatter_mean(x, idx):
        s = jax.ops.segment_sum(x, idx, num_segments=num_graphs)
        c = jax.ops.segment_sum(jnp.ones((x.shape[0],), x.dtype), idx,
                                num_segments=num_graphs)
        return s / jnp.maximum(c, 1.0)[:, None]

    c_V = scatter_mean(h_V, batch_id)
    h_V = h_V * mlp_sig(c_V[batch_id],
                        params["vw1"], params["vb1"], params["vw2"],
                        params["vb2"], params["vw3"], params["vb3"])
    c_V = scatter_mean(h_V, batch_id)
    h_E = h_E * mlp_sig(c_V[batch_id[edge_idx[0]]],
                        params["ew1"], params["eb1"], params["ew2"],
                        params["eb2"], params["ew3"], params["eb3"])
    return h_V, h_E


def init_params(key, num_hidden):
    keys = jax.random.split(key, 12)
    s = 1.0 / np.sqrt(num_hidden)

    def lin(kw, kb):
        w = jax.random.uniform(kw, (num_hidden, num_hidden), jnp.float32, -s, s)
        b = jax.random.uniform(kb, (1, num_hidden), jnp.float32, -s, s)
        return w, b

    p = {}
    (p["vw1"], p["vb1"]) = lin(keys[0], keys[1])
    (p["vw2"], p["vb2"]) = lin(keys[2], keys[3])
    (p["vw3"], p["vb3"]) = lin(keys[4], keys[5])
    (p["ew1"], p["eb1"]) = lin(keys[6], keys[7])
    (p["ew2"], p["eb2"]) = lin(keys[8], keys[9])
    (p["ew3"], p["eb3"]) = lin(keys[10], keys[11])
    return p


if __name__ == "__main__":
    num_hidden = 128    # H (lane-dense; PiFold default hidden size)
    num_graphs = 4      # B
    num_nodes = 512     # N
    num_edges = 1024    # E
    block_rows = 256    # demo tile (2 grid steps for nodes); use 512-2048 at production sizes

    key = jax.random.PRNGKey(0)
    k_hv, k_he, k_ei, k_p = jax.random.split(key, 4)

    h_V = jax.random.normal(k_hv, (num_nodes, num_hidden), jnp.float32)
    h_E = jax.random.normal(k_he, (num_edges, num_hidden), jnp.float32)
    edge_idx = jax.random.randint(k_ei, (2, num_edges), 0, num_nodes, jnp.int32)
    # Uneven graph sizes to exercise the segment mean properly.
    sizes = np.array([100, 156, 200, 56])
    assert sizes.sum() == num_nodes and len(sizes) == num_graphs
    batch_id = jnp.asarray(np.repeat(np.arange(num_graphs, dtype=np.int32), sizes))

    params = init_params(k_p, num_hidden)

    hV_out, hE_out = context_forward(h_V, h_E, edge_idx, batch_id, params,
                                     num_graphs, block_rows)
    jax.block_until_ready((hV_out, hE_out))

    hV_ref, hE_ref = reference_forward(h_V, h_E, edge_idx, batch_id, params, num_graphs)
    np.testing.assert_allclose(np.asarray(hV_out), np.asarray(hV_ref), rtol=1e-5, atol=1e-5)
    np.testing.assert_allclose(np.asarray(hE_out), np.asarray(hE_ref), rtol=1e-5, atol=1e-5)

    print("KERNEL_OK")
</pallas_src>

<mosaic_0001>
module attributes {stable_mosaic.version = 11 : i64} {
  func.func @_reduce_and_gate_kernel(%arg0: i32, %arg1: memref<1x256xi32, #tpu.memory_space<vmem>>, %arg2: memref<256x128xf32, #tpu.memory_space<vmem>>, %arg3: memref<128x128xf32, #tpu.memory_space<vmem>>, %arg4: memref<1x128xf32, #tpu.memory_space<vmem>>, %arg5: memref<128x128xf32, #tpu.memory_space<vmem>>, %arg6: memref<1x128xf32, #tpu.memory_space<vmem>>, %arg7: memref<128x128xf32, #tpu.memory_space<vmem>>, %arg8: memref<1x128xf32, #tpu.memory_space<vmem>>, %arg9: memref<128x128xf32, #tpu.memory_space<vmem>>, %arg10: memref<1x128xf32, #tpu.memory_space<vmem>>, %arg11: memref<128x128xf32, #tpu.memory_space<vmem>>, %arg12: memref<1x128xf32, #tpu.memory_space<vmem>>, %arg13: memref<128x128xf32, #tpu.memory_space<vmem>>, %arg14: memref<1x128xf32, #tpu.memory_space<vmem>>, %arg15: memref<4x128xf32, #tpu.memory_space<vmem>>, %arg16: memref<4x128xf32, #tpu.memory_space<vmem>>, %arg17: memref<4x128xf32, #tpu.memory_space<vmem>>, %arg18: memref<4x1xf32, #tpu.memory_space<vmem>>) attributes {dimension_semantics = [#tpu.dimension_semantics<arbitrary>], iteration_bounds = array<i64: 2>, scalar_prefetch = 0 : i64, scratch_operands = 2 : i64, tpu.core_type = #tpu.core_type<tc>, window_params = [{transform_indices = @transform_0, window_bounds = array<i64: 1, 256>}, {transform_indices = @transform_1, window_bounds = array<i64: 256, 128>}, {pipeline_mode = #tpu.pipeline_mode<synchronous>, transform_indices = @transform_2, window_bounds = array<i64: 128, 128>}, {pipeline_mode = #tpu.pipeline_mode<synchronous>, transform_indices = @transform_3, window_bounds = array<i64: 1, 128>}, {pipeline_mode = #tpu.pipeline_mode<synchronous>, transform_indices = @transform_4, window_bounds = array<i64: 128, 128>}, {pipeline_mode = #tpu.pipeline_mode<synchronous>, transform_indices = @transform_5, window_bounds = array<i64: 1, 128>}, {pipeline_mode = #tpu.pipeline_mode<synchronous>, transform_indices = @transform_6, window_bounds = array<i64: 128, 128>}, {pipeline_mode = #tpu.pipeline_mode<synchronous>, transform_indices = @transform_7, window_bounds = array<i64: 1, 128>}, {pipeline_mode = #tpu.pipeline_mode<synchronous>, transform_indices = @transform_8, window_bounds = array<i64: 128, 128>}, {pipeline_mode = #tpu.pipeline_mode<synchronous>, transform_indices = @transform_9, window_bounds = array<i64: 1, 128>}, {pipeline_mode = #tpu.pipeline_mode<synchronous>, transform_indices = @transform_10, window_bounds = array<i64: 128, 128>}, {pipeline_mode = #tpu.pipeline_mode<synchronous>, transform_indices = @transform_11, window_bounds = array<i64: 1, 128>}, {pipeline_mode = #tpu.pipeline_mode<synchronous>, transform_indices = @transform_12, window_bounds = array<i64: 128, 128>}, {pipeline_mode = #tpu.pipeline_mode<synchronous>, transform_indices = @transform_13, window_bounds = array<i64: 1, 128>}, {pipeline_mode = #tpu.pipeline_mode<synchronous>, transform_indices = @transform_14, window_bounds = array<i64: 4, 128>}, {pipeline_mode = #tpu.pipeline_mode<synchronous>, transform_indices = @transform_15, window_bounds = array<i64: 4, 128>}]} {
    %c0_i32 = arith.constant 0 : i32
    %0 = arith.cmpi eq, %arg0, %c0_i32 : i32
    %1 = arith.extui %0 : i1 to i32
    %c0_i32_0 = arith.constant 0 : i32
    %2 = arith.cmpi ne, %1, %c0_i32_0 : i32
    scf.if %2 {
      %cst_14 = arith.constant 0.000000e+00 : f32
      %22 = vector.broadcast %cst_14 : f32 to vector<4x128xf32>
      %c0_15 = arith.constant 0 : index
      %c0_16 = arith.constant 0 : index
      %23 = vector.load %arg17[%c0_15, %c0_16] : memref<4x128xf32, #tpu.memory_space<vmem>>, vector<4x128xf32>
      tpu.vector_store %arg17[%c0_15, %c0_16], %22 {strides = array<i32>} : memref<4x128xf32, #tpu.memory_space<vmem>>, vector<4x128xf32>,
      %cst_17 = arith.constant 0.000000e+00 : f32
      %24 = vector.broadcast %cst_17 : f32 to vector<4x1xf32>
      %c0_18 = arith.constant 0 : index
      %c0_19 = arith.constant 0 : index
      %25 = vector.load %arg18[%c0_18, %c0_19] : memref<4x1xf32, #tpu.memory_space<vmem>>, vector<4x1xf32>
      tpu.vector_store %arg18[%c0_18, %c0_19], %24 {strides = array<i32>} : memref<4x1xf32, #tpu.memory_space<vmem>>, vector<4x1xf32>,
    } else {
    }
    %c0 = arith.constant 0 : index
    %c0_1 = arith.constant 0 : index
    %3 = vector.load %arg1[%c0, %c0_1] : memref<1x256xi32, #tpu.memory_space<vmem>>, vector<1x256xi32>
    %4 = tpu.iota {dimensions = array<i32: 0>} : vector<4x256xi32>
    %5 = vector.broadcast %3 : vector<1x256xi32> to vector<4x256xi32>
    %6 = arith.cmpi eq, %5, %4 : vector<4x256xi32>
    %7 = arith.extui %6 : vector<4x256xi1> to vector<4x256xi32>
    %8 = arith.sitofp %7 : vector<4x256xi32> to vector<4x256xf32>
    %c0_2 = arith.constant 0 : index
    %c0_3 = arith.constant 0 : index
    %9 = vector.load %arg2[%c0_2, %c0_3] : memref<256x128xf32, #tpu.memory_space<vmem>>, vector<256x128xf32>
    %c0_4 = arith.constant 0 : index
    %c0_5 = arith.constant 0 : index
    %10 = vector.load %arg17[%c0_4, %c0_5] : memref<4x128xf32, #tpu.memory_space<vmem>>, vector<4x128xf32>
    %cst = arith.constant dense<0.000000e+00> : vector<4x128xf32>
    %11 = tpu.matmul %8, %9, %cst {dimension_numbers = #tpu.dot_dimension_numbers<[1], [0], [0], [1], [0, 0, 1, 1], [], []>} : vector<4x256xf32>, vector<256x128xf32>, vector<4x128xf32> -> vector<4x128xf32>
    %12 = arith.addf %10, %11 : vector<4x128xf32>
    %c0_6 = arith.constant 0 : index
    %c0_7 = arith.constant 0 : index
    %13 = vector.load %arg17[%c0_6, %c0_7] : memref<4x128xf32, #tpu.memory_space<vmem>>, vector<4x128xf32>
    tpu.vector_store %arg17[%c0_6, %c0_7], %12 {strides = array<i32>} : memref<4x128xf32, #tpu.memory_space<vmem>>, vector<4x128xf32>,
    %c0_8 = arith.constant 0 : index
    %c0_9 = arith.constant 0 : index
    %14 = vector.load %arg18[%c0_8, %c0_9] : memref<4x1xf32, #tpu.memory_space<vmem>>, vector<4x1xf32>
    %cst_10 = arith.constant dense<0.000000e+00> : vector<4xf32>
    %15 = vector.multi_reduction <add>, %8, %cst_10 [1] : vector<4x256xf32> to vector<4xf32>
    %16 = vector.shape_cast %15 : vector<4xf32> to vector<4x1xf32>
    %17 = arith.addf %14, %16 : vector<4x1xf32>
    %c0_11 = arith.constant 0 : index
    %c0_12 = arith.constant 0 : index
    %18 = vector.load %arg18[%c0_11, %c0_12] : memref<4x1xf32, #tpu.memory_space<vmem>>, vector<4x1xf32>
    tpu.vector_store %arg18[%c0_11, %c0_12], %17 {strides = array<i32>} : memref<4x1xf32, #tpu.memory_space<vmem>>, vector<4x1xf32>,
    %c1_i32 = arith.constant 1 : i32
    %19 = arith.cmpi eq, %arg0, %c1_i32 : i32
    %20 = arith.extui %19 : i1 to i32
    %c0_i32_13 = arith.constant 0 : i32
    %21 = arith.cmpi ne, %20, %c0_i32_13 : i32
    scf.if %21 {
      %c0_14 = arith.constant 0 : index
      %c0_15 = arith.constant 0 : index
      %22 = vector.load %arg17[%c0_14, %c0_15] : memref<4x128xf32, #tpu.memory_space<vmem>>, vector<4x128xf32>
      %c0_16 = arith.constant 0 : index
      %c0_17 = arith.constant 0 : index
      %23 = vector.load %arg18[%c0_16, %c0_17] : memref<4x1xf32, #tpu.memory_space<vmem>>, vector<4x1xf32>
      %cst_18 = arith.constant 1.000000e+00 : f32
      %24 = vector.broadcast %cst_18 : f32 to vector<4x1xf32>
      %25 = arith.maximumf %23, %24 : vector<4x1xf32>
      %26 = vector.broadcast %25 : vector<4x1xf32> to vector<4x128xf32>
      %27 = arith.divf %22, %26 : vector<4x128xf32>
      %c0_19 = arith.constant 0 : index
      %c0_20 = arith.constant 0 : index
      %28 = vector.load %arg3[%c0_19, %c0_20] : memref<128x128xf32, #tpu.memory_space<vmem>>, vector<128x128xf32>
      %cst_21 = arith.constant dense<0.000000e+00> : vector<4x128xf32>
      %29 = tpu.matmul %27, %28, %cst_21 {dimension_numbers = #tpu.dot_dimension_numbers<[1], [0], [0], [1], [0, 0, 1, 1], [], []>} : vector<4x128xf32>, vector<128x128xf32>, vector<4x128xf32> -> vector<4x128xf32>
      %c0_22 = arith.constant 0 : index
      %c0_23 = arith.constant 0 : index
      %30 = vector.load %arg4[%c0_22, %c0_23] : memref<1x128xf32, #tpu.memory_space<vmem>>, vector<1x128xf32>
      %31 = vector.broadcast %30 : vector<1x128xf32> to vector<4x128xf32>
      %32 = arith.addf %29, %31 : vector<4x128xf32>
      %cst_24 = arith.constant 0.000000e+00 : f32
      %33 = vector.broadcast %cst_24 : f32 to vector<4x128xf32>
      %34 = arith.maximumf %32, %33 : vector<4x128xf32>
      %c0_25 = arith.constant 0 : index
      %c0_26 = arith.constant 0 : index
      %35 = vector.load %arg5[%c0_25, %c0_26] : memref<128x128xf32, #tpu.memory_space<vmem>>, vector<128x128xf32>
      %cst_27 = arith.constant dense<0.000000e+00> : vector<4x128xf32>
      %36 = tpu.matmul %34, %35, %cst_27 {dimension_numbers = #tpu.dot_dimension_numbers<[1], [0], [0], [1], [0, 0, 1, 1], [], []>} : vector<4x128xf32>, vector<128x128xf32>, vector<4x128xf32> -> vector<4x128xf32>
      %c0_28 = arith.constant 0 : index
      %c0_29 = arith.constant 0 : index
      %37 = vector.load %arg6[%c0_28, %c0_29] : memref<1x128xf32, #tpu.memory_space<vmem>>, vector<1x128xf32>
      %38 = vector.broadcast %37 : vector<1x128xf32> to vector<4x128xf32>
      %39 = arith.addf %36, %38 : vector<4x128xf32>
      %cst_30 = arith.constant 0.000000e+00 : f32
      %40 = vector.broadcast %cst_30 : f32 to vector<4x128xf32>
      %41 = arith.maximumf %39, %40 : vector<4x128xf32>
      %c0_31 = arith.constant 0 : index
      %c0_32 = arith.constant 0 : index
      %42 = vector.load %arg7[%c0_31, %c0_32] : memref<128x128xf32, #tpu.memory_space<vmem>>, vector<128x128xf32>
      %cst_33 = arith.constant dense<0.000000e+00> : vector<4x128xf32>
      %43 = tpu.matmul %41, %42, %cst_33 {dimension_numbers = #tpu.dot_dimension_numbers<[1], [0], [0], [1], [0, 0, 1, 1], [], []>} : vector<4x128xf32>, vector<128x128xf32>, vector<4x128xf32> -> vector<4x128xf32>
      %c0_34 = arith.constant 0 : index
      %c0_35 = arith.constant 0 : index
      %44 = vector.load %arg8[%c0_34, %c0_35] : memref<1x128xf32, #tpu.memory_space<vmem>>, vector<1x128xf32>
      %45 = vector.broadcast %44 : vector<1x128xf32> to vector<4x128xf32>
      %46 = arith.addf %43, %45 : vector<4x128xf32>
      %47 = arith.negf %46 : vector<4x128xf32>
      %48 = math.exp %47 : vector<4x128xf32>
      %cst_36 = arith.constant 1.000000e+00 : f32
      %49 = vector.broadcast %cst_36 : f32 to vector<4x128xf32>
      %50 = arith.addf %49, %48 : vector<4x128xf32>
      %51 = arith.divf %49, %50 : vector<4x128xf32>
      %52 = arith.mulf %27, %51 : vector<4x128xf32>
      %c0_37 = arith.constant 0 : index
      %c0_38 = arith.constant 0 : index
      %53 = vector.load %arg9[%c0_37, %c0_38] : memref<128x128xf32, #tpu.memory_space<vmem>>, vector<128x128xf32>
      %cst_39 = arith.constant dense<0.000000e+00> : vector<4x128xf32>
      %54 = tpu.matmul %52, %53, %cst_39 {dimension_numbers = #tpu.dot_dimension_numbers<[1], [0], [0], [1], [0, 0, 1, 1], [], []>} : vector<4x128xf32>, vector<128x128xf32>, vector<4x128xf32> -> vector<4x128xf32>
      %c0_40 = arith.constant 0 : index
      %c0_41 = arith.constant 0 : index
      %55 = vector.load %arg10[%c0_40, %c0_41] : memref<1x128xf32, #tpu.memory_space<vmem>>, vector<1x128xf32>
      %56 = vector.broadcast %55 : vector<1x128xf32> to vector<4x128xf32>
      %57 = arith.addf %54, %56 : vector<4x128xf32>
      %cst_42 = arith.constant 0.000000e+00 : f32
      %58 = vector.broadcast %cst_42 : f32 to vector<4x128xf32>
      %59 = arith.maximumf %57, %58 : vector<4x128xf32>
      %c0_43 = arith.constant 0 : index
      %c0_44 = arith.constant 0 : index
      %60 = vector.load %arg11[%c0_43, %c0_44] : memref<128x128xf32, #tpu.memory_space<vmem>>, vector<128x128xf32>
      %cst_45 = arith.constant dense<0.000000e+00> : vector<4x128xf32>
      %61 = tpu.matmul %59, %60, %cst_45 {dimension_numbers = #tpu.dot_dimension_numbers<[1], [0], [0], [1], [0, 0, 1, 1], [], []>} : vector<4x128xf32>, vector<128x128xf32>, vector<4x128xf32> -> vector<4x128xf32>
      %c0_46 = arith.constant 0 : index
      %c0_47 = arith.constant 0 : index
      %62 = vector.load %arg12[%c0_46, %c0_47] : memref<1x128xf32, #tpu.memory_space<vmem>>, vector<1x128xf32>
      %63 = vector.broadcast %62 : vector<1x128xf32> to vector<4x128xf32>
      %64 = arith.addf %61, %63 : vector<4x128xf32>
      %cst_48 = arith.constant 0.000000e+00 : f32
      %65 = vector.broadcast %cst_48 : f32 to vector<4x128xf32>
      %66 = arith.maximumf %64, %65 : vector<4x128xf32>
      %c0_49 = arith.constant 0 : index
      %c0_50 = arith.constant 0 : index
      %67 = vector.load %arg13[%c0_49, %c0_50] : memref<128x128xf32, #tpu.memory_space<vmem>>, vector<128x128xf32>
      %cst_51 = arith.constant dense<0.000000e+00> : vector<4x128xf32>
      %68 = tpu.matmul %66, %67, %cst_51 {dimension_numbers = #tpu.dot_dimension_numbers<[1], [0], [0], [1], [0, 0, 1, 1], [], []>} : vector<4x128xf32>, vector<128x128xf32>, vector<4x128xf32> -> vector<4x128xf32>
      %c0_52 = arith.constant 0 : index
      %c0_53 = arith.constant 0 : index
      %69 = vector.load %arg14[%c0_52, %c0_53] : memref<1x128xf32, #tpu.memory_space<vmem>>, vector<1x128xf32>
      %70 = vector.broadcast %69 : vector<1x128xf32> to vector<4x128xf32>
      %71 = arith.addf %68, %70 : vector<4x128xf32>
      %72 = arith.negf %71 : vector<4x128xf32>
      %73 = math.exp %72 : vector<4x128xf32>
      %cst_54 = arith.constant 1.000000e+00 : f32
      %74 = vector.broadcast %cst_54 : f32 to vector<4x128xf32>
      %75 = arith.addf %74, %73 : vector<4x128xf32>
      %76 = arith.divf %74, %75 : vector<4x128xf32>
      %c0_55 = arith.constant 0 : index
      %c0_56 = arith.constant 0 : index
      %77 = vector.load %arg15[%c0_55, %c0_56] : memref<4x128xf32, #tpu.memory_space<vmem>>, vector<4x128xf32>
      tpu.vector_store %arg15[%c0_55, %c0_56], %51 {strides = array<i32>} : memref<4x128xf32, #tpu.memory_space<vmem>>, vector<4x128xf32>,
      %c0_57 = arith.constant 0 : index
      %c0_58 = arith.constant 0 : index
      %78 = vector.load %arg16[%c0_57, %c0_58] : memref<4x128xf32, #tpu.memory_space<vmem>>, vector<4x128xf32>
      tpu.vector_store %arg16[%c0_57, %c0_58], %76 {strides = array<i32>} : memref<4x128xf32, #tpu.memory_space<vmem>>, vector<4x128xf32>,
    } else {
    }
    return
  }
  func.func @transform_0(%arg0: i32) -> (i32, i32) {
    %c0_i32 = arith.constant 0 : i32
    %c0_i32_0 = arith.constant 0 : i32
    return %c0_i32, %arg0 : i32, i32
  }
  func.func @transform_1(%arg0: i32) -> (i32, i32) {
    %c0_i32 = arith.constant 0 : i32
    %c0_i32_0 = arith.constant 0 : i32
    return %arg0, %c0_i32 : i32, i32
  }
  func.func @transform_2(%arg0: i32) -> (i32, i32) {
    %c0_i32 = arith.constant 0 : i32
    %c0_i32_0 = arith.constant 0 : i32
    %c0_i32_1 = arith.constant 0 : i32
    return %c0_i32, %c0_i32_0 : i32, i32
  }
  func.func @transform_3(%arg0: i32) -> (i32, i32) {
    %c0_i32 = arith.constant 0 : i32
    %c0_i32_0 = arith.constant 0 : i32
    %c0_i32_1 = arith.constant 0 : i32
    return %c0_i32, %c0_i32_0 : i32, i32
  }
  func.func @transform_4(%arg0: i32) -> (i32, i32) {
    %c0_i32 = arith.constant 0 : i32
    %c0_i32_0 = arith.constant 0 : i32
    %c0_i32_1 = arith.constant 0 : i32
    return %c0_i32, %c0_i32_0 : i32, i32
  }
  func.func @transform_5(%arg0: i32) -> (i32, i32) {
    %c0_i32 = arith.constant 0 : i32
    %c0_i32_0 = arith.constant 0 : i32
    %c0_i32_1 = arith.constant 0 : i32
    return %c0_i32, %c0_i32_0 : i32, i32
  }
  func.func @transform_6(%arg0: i32) -> (i32, i32) {
    %c0_i32 = arith.constant 0 : i32
    %c0_i32_0 = arith.constant 0 : i32
    %c0_i32_1 = arith.constant 0 : i32
    return %c0_i32, %c0_i32_0 : i32, i32
  }
  func.func @transform_7(%arg0: i32) -> (i32, i32) {
    %c0_i32 = arith.constant 0 : i32
    %c0_i32_0 = arith.constant 0 : i32
    %c0_i32_1 = arith.constant 0 : i32
    return %c0_i32, %c0_i32_0 : i32, i32
  }
  func.func @transform_8(%arg0: i32) -> (i32, i32) {
    %c0_i32 = arith.constant 0 : i32
    %c0_i32_0 = arith.constant 0 : i32
    %c0_i32_1 = arith.constant 0 : i32
    return %c0_i32, %c0_i32_0 : i32, i32
  }
  func.func @transform_9(%arg0: i32) -> (i32, i32) {
    %c0_i32 = arith.constant 0 : i32
    %c0_i32_0 = arith.constant 0 : i32
    %c0_i32_1 = arith.constant 0 : i32
    return %c0_i32, %c0_i32_0 : i32, i32
  }
  func.func @transform_10(%arg0: i32) -> (i32, i32) {
    %c0_i32 = arith.constant 0 : i32
    %c0_i32_0 = arith.constant 0 : i32
    %c0_i32_1 = arith.constant 0 : i32
    return %c0_i32, %c0_i32_0 : i32, i32
  }
  func.func @transform_11(%arg0: i32) -> (i32, i32) {
    %c0_i32 = arith.constant 0 : i32
    %c0_i32_0 = arith.constant 0 : i32
    %c0_i32_1 = arith.constant 0 : i32
    return %c0_i32, %c0_i32_0 : i32, i32
  }
  func.func @transform_12(%arg0: i32) -> (i32, i32) {
    %c0_i32 = arith.constant 0 : i32
    %c0_i32_0 = arith.constant 0 : i32
    %c0_i32_1 = arith.constant 0 : i32
    return %c0_i32, %c0_i32_0 : i32, i32
  }
  func.func @transform_13(%arg0: i32) -> (i32, i32) {
    %c0_i32 = arith.constant 0 : i32
    %c0_i32_0 = arith.constant 0 : i32
    %c0_i32_1 = arith.constant 0 : i32
    return %c0_i32, %c0_i32_0 : i32, i32
  }
  func.func @transform_14(%arg0: i32) -> (i32, i32) {
    %c0_i32 = arith.constant 0 : i32
    %c0_i32_0 = arith.constant 0 : i32
    %c0_i32_1 = arith.constant 0 : i32
    return %c0_i32, %c0_i32_0 : i32, i32
  }
  func.func @transform_15(%arg0: i32) -> (i32, i32) {
    %c0_i32 = arith.constant 0 : i32
    %c0_i32_0 = arith.constant 0 : i32
    %c0_i32_1 = arith.constant 0 : i32
    return %c0_i32, %c0_i32_0 : i32, i32
  }
}

module attributes {stable_mosaic.version = 11 : i64} {
  func.func @_apply_gate_kernel(%arg0: i32, %arg1: memref<1x256xi32, #tpu.memory_space<vmem>>, %arg2: memref<4x128xf32, #tpu.memory_space<vmem>>, %arg3: memref<256x128xf32, #tpu.memory_space<vmem>>, %arg4: memref<256x128xf32, #tpu.memory_space<vmem>>) attributes {dimension_semantics = [#tpu.dimension_semantics<parallel>], iteration_bounds = array<i64: 2>, scalar_prefetch = 0 : i64, scratch_operands = 0 : i64, tpu.core_type = #tpu.core_type<tc>, window_params = [{transform_indices = @transform_0, window_bounds = array<i64: 1, 256>}, {pipeline_mode = #tpu.pipeline_mode<synchronous>, transform_indices = @transform_1, window_bounds = array<i64: 4, 128>}, {transform_indices = @transform_2, window_bounds = array<i64: 256, 128>}, {transform_indices = @transform_3, window_bounds = array<i64: 256, 128>}]} {
    %c0 = arith.constant 0 : index
    %c0_0 = arith.constant 0 : index
    %0 = vector.load %arg1[%c0, %c0_0] : memref<1x256xi32, #tpu.memory_space<vmem>>, vector<1x256xi32>
    %1 = tpu.iota {dimensions = array<i32: 0>} : vector<4x256xi32>
    %2 = vector.broadcast %0 : vector<1x256xi32> to vector<4x256xi32>
    %3 = arith.cmpi eq, %2, %1 : vector<4x256xi32>
    %4 = arith.extui %3 : vector<4x256xi1> to vector<4x256xi32>
    %5 = arith.sitofp %4 : vector<4x256xi32> to vector<4x256xf32>
    %c0_1 = arith.constant 0 : index
    %c0_2 = arith.constant 0 : index
    %6 = vector.load %arg2[%c0_1, %c0_2] : memref<4x128xf32, #tpu.memory_space<vmem>>, vector<4x128xf32>
    %cst = arith.constant dense<0.000000e+00> : vector<256x128xf32>
    %7 = tpu.matmul %5, %6, %cst {dimension_numbers = #tpu.dot_dimension_numbers<[0], [0], [1], [1], [0, 1, 1, 1], [], []>} : vector<4x256xf32>, vector<4x128xf32>, vector<256x128xf32> -> vector<256x128xf32>
    %c0_3 = arith.constant 0 : index
    %c0_4 = arith.constant 0 : index
    %8 = vector.load %arg3[%c0_3, %c0_4] : memref<256x128xf32, #tpu.memory_space<vmem>>, vector<256x128xf32>
    %9 = arith.mulf %8, %7 : vector<256x128xf32>
    %c0_5 = arith.constant 0 : index
    %c0_6 = arith.constant 0 : index
    %10 = vector.load %arg4[%c0_5, %c0_6] : memref<256x128xf32, #tpu.memory_space<vmem>>, vector<256x128xf32>
    tpu.vector_store %arg4[%c0_5, %c0_6], %9 {strides = array<i32>} : memref<256x128xf32, #tpu.memory_space<vmem>>, vector<256x128xf32>,
    return
  }
  func.func @transform_0(%arg0: i32) -> (i32, i32) {
    %c0_i32 = arith.constant 0 : i32
    %c0_i32_0 = arith.constant 0 : i32
    return %c0_i32, %arg0 : i32, i32
  }
  func.func @transform_1(%arg0: i32) -> (i32, i32) {
    %c0_i32 = arith.constant 0 : i32
    %c0_i32_0 = arith.constant 0 : i32
    %c0_i32_1 = arith.constant 0 : i32
    return %c0_i32, %c0_i32_0 : i32, i32
  }
  func.func @transform_2(%arg0: i32) -> (i32, i32) {
    %c0_i32 = arith.constant 0 : i32
    %c0_i32_0 = arith.constant 0 : i32
    return %arg0, %c0_i32 : i32, i32
  }
  func.func @transform_3(%arg0: i32) -> (i32, i32) {
    %c0_i32 = arith.constant 0 : i32
    %c0_i32_0 = arith.constant 0 : i32
    return %arg0, %c0_i32 : i32, i32
  }
}

module attributes {stable_mosaic.version = 11 : i64} {
  func.func @_apply_gate_kernel(%arg0: i32, %arg1: memref<1x256xi32, #tpu.memory_space<vmem>>, %arg2: memref<4x128xf32, #tpu.memory_space<vmem>>, %arg3: memref<256x128xf32, #tpu.memory_space<vmem>>, %arg4: memref<256x128xf32, #tpu.memory_space<vmem>>) attributes {dimension_semantics = [#tpu.dimension_semantics<parallel>], iteration_bounds = array<i64: 4>, scalar_prefetch = 0 : i64, scratch_operands = 0 : i64, tpu.core_type = #tpu.core_type<tc>, window_params = [{transform_indices = @transform_0, window_bounds = array<i64: 1, 256>}, {pipeline_mode = #tpu.pipeline_mode<synchronous>, transform_indices = @transform_1, window_bounds = array<i64: 4, 128>}, {transform_indices = @transform_2, window_bounds = array<i64: 256, 128>}, {transform_indices = @transform_3, window_bounds = array<i64: 256, 128>}]} {
    %c0 = arith.constant 0 : index
    %c0_0 = arith.constant 0 : index
    %0 = vector.load %arg1[%c0, %c0_0] : memref<1x256xi32, #tpu.memory_space<vmem>>, vector<1x256xi32>
    %1 = tpu.iota {dimensions = array<i32: 0>} : vector<4x256xi32>
    %2 = vector.broadcast %0 : vector<1x256xi32> to vector<4x256xi32>
    %3 = arith.cmpi eq, %2, %1 : vector<4x256xi32>
    %4 = arith.extui %3 : vector<4x256xi1> to vector<4x256xi32>
    %5 = arith.sitofp %4 : vector<4x256xi32> to vector<4x256xf32>
    %c0_1 = arith.constant 0 : index
    %c0_2 = arith.constant 0 : index
    %6 = vector.load %arg2[%c0_1, %c0_2] : memref<4x128xf32, #tpu.memory_space<vmem>>, vector<4x128xf32>
    %cst = arith.constant dense<0.000000e+00> : vector<256x128xf32>
    %7 = tpu.matmul %5, %6, %cst {dimension_numbers = #tpu.dot_dimension_numbers<[0], [0], [1], [1], [0, 1, 1, 1], [], []>} : vector<4x256xf32>, vector<4x128xf32>, vector<256x128xf32> -> vector<256x128xf32>
    %c0_3 = arith.constant 0 : index
    %c0_4 = arith.constant 0 : index
    %8 = vector.load %arg3[%c0_3, %c0_4] : memref<256x128xf32, #tpu.memory_space<vmem>>, vector<256x128xf32>
    %9 = arith.mulf %8, %7 : vector<256x128xf32>
    %c0_5 = arith.constant 0 : index
    %c0_6 = arith.constant 0 : index
    %10 = vector.load %arg4[%c0_5, %c0_6] : memref<256x128xf32, #tpu.memory_space<vmem>>, vector<256x128xf32>
    tpu.vector_store %arg4[%c0_5, %c0_6], %9 {strides = array<i32>} : memref<256x128xf32, #tpu.memory_space<vmem>>, vector<256x128xf32>,
    return
  }
  func.func @transform_0(%arg0: i32) -> (i32, i32) {
    %c0_i32 = arith.constant 0 : i32
    %c0_i32_0 = arith.constant 0 : i32
    return %c0_i32, %arg0 : i32, i32
  }
  func.func @transform_1(%arg0: i32) -> (i32, i32) {
    %c0_i32 = arith.constant 0 : i32
    %c0_i32_0 = arith.constant 0 : i32
    %c0_i32_1 = arith.constant 0 : i32
    return %c0_i32, %c0_i32_0 : i32, i32
  }
  func.func @transform_2(%arg0: i32) -> (i32, i32) {
    %c0_i32 = arith.constant 0 : i32
    %c0_i32_0 = arith.constant 0 : i32
    return %arg0, %c0_i32 : i32, i32
  }
  func.func @transform_3(%arg0: i32) -> (i32, i32) {
    %c0_i32 = arith.constant 0 : i32
    %c0_i32_0 = arith.constant 0 : i32
    return %arg0, %c0_i32 : i32, i32
  }
}

</mosaic_0001>

<llo_original>
// kernel: context_forward.4
$region0: #{context_forward.4}
  #allocation0 [shape = 'u32[]', space=smem, size = 0x4, offset = 0x4, fixed_abs, tag = 'smem constant byte address 0x4 - core index']
  #allocation1 [shape = 'u32[72,128]{1,0:T(1,128)}', space=vmem, size = 0x9000, scoped, tag = 'internal scratch']
  %s0 = inlined_call_operand.vmem [shape: s32[1,512], index: 0, kind: input, shape index: {}]
  %s1 = inlined_call_operand.vmem [shape: f32[4,128], index: 1, kind: input, shape index: {}]
  %s2 = inlined_call_operand.vmem [shape: f32[512,128], index: 2, kind: input, shape index: {}, may-alias: {2,3}]
  %s3 = inlined_call_operand.vmem [shape: f32[512,128], index: 3, kind: output, shape index: {}, may-alias: {2,3}]
  %s4 = sld [smem:[#allocation0]]
  $region45: #{context_forward.4} parent=0
    _
  %s6 = ssub.s32 1, %s4
  %s7 = scalar_select 0, %s6, %s4
  loop: start=0, step=1, limit=4
  $region2: #{context_forward.4} parent=0 // loop_pre_header
    _
  $region3: #{context_forward.4} parent=0 // loop_header
    %s9 = sphi 0, %s13
    %p10 = scmp.ge.s32.totalorder %s9, 4
    %s19 = sphi 0, %s21
    %s22 = sphi 0, %s19
    %s23 = sphi 0, %s22
    %s39 = sphi 0, %s23
    %s43 = sphi 0, %s43
    %s45 = sphi 0, %s43
    %s46 = sphi 0, %s45
    %s60 = sphi 0, %s46
    %s66 = sphi 0, %s68
    %s69 = sphi 0, %s66
    %s70 = sphi 0, %s69
    %s86 = sphi 0, %s70
    %s92 = sphi 0, %s94
    %s95 = sphi 0, %s92
    %s96 = sphi 0, %s95
    %s112 = sphi 0, %s96
  $region4: #{context_forward.4} parent=0 // loop_header_branch
    %12 = sbr.rel (%p10) target = $region8
  $region5: #{context_forward.4} parent=0 // loop_body
    %s14 = ssub.s32 %s9, 1
    %s15 = ssub.s32 %s9, 2
    %s16 = sadd.s32 %s9, 1
    %s17 = ssub.s32 %s9, %s16
    %p18 = scmp.eq.s32.totalorder %s17, 0
    %s20 = sadd.s32 %s19, 1
    %s21 = scalar_select %p18, %s19, %s20
    %p24 = pneg %p18
    %p25 = scmp.eq.s32.totalorder %s9, 1
    %p26 = por %p24, %p25
    %p27 = scmp.ne.s32.totalorder %s19, %s22
    %p28 = scmp.eq.s32.totalorder %s9, 0
    %p29 = por %p27, %p28
    %p30 = scmp.ne.s32.totalorder %s19, %s22
    %p31 = scmp.eq.s32.totalorder %s14, 1
    %p32 = por %p30, %p31
    %p33 = scmp.ne.s32.totalorder %s22, %s23
    %p34 = scmp.eq.s32.totalorder %s14, 0
    %p35 = por %p33, %p34
    %p36 = scmp.ne.s32.totalorder %s22, %s23
    %p37 = scmp.eq.s32.totalorder %s15, 1
    %p38 = por %p36, %p37
    %p40 = scmp.ne.s32.totalorder %s23, %s39
    %p41 = scmp.eq.s32.totalorder %s15, 0
    %p42 = por %p40, %p41
    %s44 = sadd.s32 %s43, 1
    %p47 = scmp.eq.s32.totalorder %s9, 1
    %p48 = scmp.ne.s32.totalorder %s43, %s45
    %p49 = scmp.eq.s32.totalorder %s9, 0
    %p50 = por %p48, %p49
    %p51 = scmp.ne.s32.totalorder %s43, %s45
    %p52 = scmp.eq.s32.totalorder %s14, 1
    %p53 = por %p51, %p52
    %p54 = scmp.ne.s32.totalorder %s45, %s46
    %p55 = scmp.eq.s32.totalorder %s14, 0
    %p56 = por %p54, %p55
    %p57 = scmp.ne.s32.totalorder %s45, %s46
    %p58 = scmp.eq.s32.totalorder %s15, 1
    %p59 = por %p57, %p58
    %p61 = scmp.ne.s32.totalorder %s46, %s60
    %p62 = scmp.eq.s32.totalorder %s15, 0
    %p63 = por %p61, %p62
    %s64 = ssub.s32 %s9, %s16
    %p65 = scmp.eq.s32.totalorder %s64, 0
    %s67 = sadd.s32 %s66, 1
    %s68 = scalar_select %p65, %s66, %s67
    %p71 = pneg %p65
    %p72 = scmp.eq.s32.totalorder %s9, 1
    %p73 = por %p71, %p72
    %p74 = scmp.ne.s32.totalorder %s66, %s69
    %p75 = scmp.eq.s32.totalorder %s9, 0
    %p76 = por %p74, %p75
    %p77 = scmp.ne.s32.totalorder %s66, %s69
    %p78 = scmp.eq.s32.totalorder %s14, 1
    %p79 = por %p77, %p78
    %p80 = scmp.ne.s32.totalorder %s69, %s70
    %p81 = scmp.eq.s32.totalorder %s14, 0
    %p82 = por %p80, %p81
    %p83 = scmp.ne.s32.totalorder %s69, %s70
    %p84 = scmp.eq.s32.totalorder %s15, 1
    %p85 = por %p83, %p84
    %p87 = scmp.ne.s32.totalorder %s70, %s86
    %p88 = scmp.eq.s32.totalorder %s15, 0
    %p89 = por %p87, %p88
    %s90 = ssub.s32 %s9, %s16
    %p91 = scmp.eq.s32.totalorder %s90, 0
    %s93 = sadd.s32 %s92, 1
    %s94 = scalar_select %p91, %s92, %s93
    %p97 = pneg %p91
    %p98 = scmp.eq.s32.totalorder %s9, 1
    %p99 = por %p97, %p98
    %p100 = scmp.ne.s32.totalorder %s92, %s95
    %p101 = scmp.eq.s32.totalorder %s9, 0
    %p102 = por %p100, %p101
    %p103 = scmp.ne.s32.totalorder %s92, %s95
    %p104 = scmp.eq.s32.totalorder %s14, 1
    %p105 = por %p103, %p104
    %p106 = scmp.ne.s32.totalorder %s95, %s96
    %p107 = scmp.eq.s32.totalorder %s14, 0
    %p108 = por %p106, %p107
    %p109 = scmp.ne.s32.totalorder %s95, %s96
    %p110 = scmp.eq.s32.totalorder %s15, 1
    %p111 = por %p109, %p110
    %p113 = scmp.ne.s32.totalorder %s96, %s112
    %p114 = scmp.eq.s32.totalorder %s15, 0
    %p115 = por %p113, %p114
    %p116 = scmp.le.s32.totalorder 1, %s9
    %p117 = scmp.lt.s32.totalorder %s9, 3
    %p118 = pnand %p116, %p117
    %p119 = pneg %p118
    // Predicated region
    $region9: #{context_forward.4} parent=5 // pred_check
      _
    $region10: #{context_forward.4} parent=5 // pred_check_branch
      %121 = sbr.rel (%p118) target = $region12
    $region11: #{context_forward.4} parent=5 // pred_region
      %s122 = ssub.s32 %s9, 1
      // Predicated region
      $region13: #{context_forward.4} parent=11 // pred_check
        %p123 = pneg %p56
      $region14: #{context_forward.4} parent=11 // pred_check_branch
        %125 = sbr.rel (%p123) target = $region16
      $region15: #{context_forward.4} parent=11 // pred_region
        _
      $region16: #{context_forward.4} parent=11 // pred_fallthru
        _
    $region12: #{context_forward.4} parent=5 // pred_fallthru
      _
    %p126 = scmp.lt.s32.totalorder %s9, 2
    // Predicated region
    $region17: #{context_forward.4} parent=5 // pred_check
      %p127 = pneg %p126
    $region18: #{context_forward.4} parent=5 // pred_check_branch
      %129 = sbr.rel (%p127) target = $region20
    $region19: #{context_forward.4} parent=5 // pred_region
      // Predicated region
      $region21: #{context_forward.4} parent=19 // pred_check
        %p130 = pneg %p29
      $region22: #{context_forward.4} parent=19 // pred_check_branch
        %132 = sbr.rel (%p130) target = $region24
      $region23: #{context_forward.4} parent=19 // pred_region
        %s133 = smul.u32 2, %s9
        %p134 = scmp.lt.s32.totalorder %s133, 3
        %s135 = scalar_select %p134, %s133, 3
        %s136 = scalar_lea.vmem %s0, %s135
        %s137 = smul.u32 2, %s9
      $region24: #{context_forward.4} parent=19 // pred_fallthru
        _
      // Predicated region
      $region25: #{context_forward.4} parent=19 // pred_check
        %p138 = pneg %p76
      $region26: #{context_forward.4} parent=19 // pred_check_branch
        %140 = sbr.rel (%p138) target = $region28
      $region27: #{context_forward.4} parent=19 // pred_region
        %s141 = smul.u32 32, %s9
        %p142 = scmp.lt.s32.totalorder %s141, 63
        %s143 = scalar_select %p142, %s141, 63
        %s144 = smul.addr %s143, 8
        %s145 = scalar_lea.vmem %s2, %s144
        %s146 = smul.u32 32, %s9
      $region28: #{context_forward.4} parent=19 // pred_fallthru
        _
    $region20: #{context_forward.4} parent=5 // pred_fallthru
      _
    %p147 = scmp.le.s32.totalorder 1, %s9
    %p148 = scmp.lt.s32.totalorder %s9, 3
    %p149 = pnand %p147, %p148
    %p150 = pneg %p149
    // Predicated region
    $region29: #{context_forward.4} parent=5 // pred_check
      _
    $region30: #{context_forward.4} parent=5 // pred_check_branch
      %152 = sbr.rel (%p149) target = $region32
    $region31: #{context_forward.4} parent=5 // pred_region
      %s153 = ssub.s32 %s9, 1
      %s154 = smul.u32 2, %s14
      %p155 = scmp.lt.s32.totalorder %s154, 3
      %s156 = scalar_select %p155, %s154, 3
      %s157 = scalar_lea.vmem %s0, %s156
      %p158 = pneg %p35
      %p159 = pneg %p32
      %p160 = pneg %p56
      %p161 = pneg %p53
      %s162 = smul.u32 32, %s14
      %p163 = scmp.lt.s32.totalorder %s162, 63
      %s164 = scalar_select %p163, %s162, 63
      %s165 = smul.addr %s164, 8
      %s166 = scalar_lea.vmem %s2, %s165
      %p167 = pneg %p82
      %p168 = pneg %p79
      %p169 = pneg %p108
      %p170 = pneg %p105
      %s171 = smul.u32 32, %s14
      %p172 = scmp.lt.s32.totalorder %s171, 63
      %s173 = scalar_select %p172, %s171, 63
      %s174 = smul.addr %s173, 8
      %s175 = scalar_lea.vmem %s3, %s174
      %s176 = smul.u32 2, %s14
      %p177 = scmp.lt.s32.totalorder %s176, 3
      %s178 = scalar_select %p177, %s176, 3
      %s179 = scalar_lea.vmem %s0, %s178
      %s180 = smul.u32 2, %s14
      %s181 = smul.u32 32, %s14
      %p182 = scmp.lt.s32.totalorder %s181, 63
      %s183 = scalar_select %p182, %s181, 63
      %s184 = smul.addr %s183, 8
      %s185 = scalar_lea.vmem %s2, %s184
      %s186 = smul.u32 32, %s14
      %s187 = smul.u32 32, %s14
      %p188 = scmp.lt.s32.totalorder %s187, 63
      %s189 = scalar_select %p188, %s187, 63
      %s190 = smul.addr %s189, 8
      %s191 = scalar_lea.vmem %s3, %s190
      %s192 = smul.u32 32, %s14
      %v193 = vld [vmem:[%s179] sm:$0x3]
      %v194 = vlaneseq
      %v195 = vshrl.u32 %v194, 7
      %v196 = vperm.slane %v193, 0
      %v197 = vperm.slane %v193, 1
      %vm198 = vcmp.eq.s32.totalorder %v196, %v195
      %vm199 = vcmp.eq.s32.totalorder %v197, %v195
      %v200 = vsel %vm198, 1, 0
      %v201 = vsel %vm199, 1, 0
      %v202 = vcvt.s32.f32 %v200
      %v203 = vcvt.s32.f32 %v201
      %v204 = vld [vmem:[%s1] sm:$0xf]
      %205 = vxpose.xlu0.b32.start [1/16] %v202, 128
      %206 = vxpose.xlu0.b32.cont [2/16] 0.0, 128
      %207 = vxpose.xlu0.b32.cont [3/16] 0.0, 128
      %208 = vxpose.xlu0.b32.cont [4/16] 0.0, 128
      %209 = vxpose.xlu0.b32.cont [5/16] 0.0, 128
      %210 = vxpose.xlu0.b32.cont [6/16] 0.0, 128
      %211 = vxpose.xlu0.b32.cont [7/16] 0.0, 128
      %212 = vxpose.xlu0.b32.cont [8/16] 0.0, 128
      %213 = vxpose.xlu0.b32.cont [9/16] 0.0, 128
      %214 = vxpose.xlu0.b32.cont [10/16] 0.0, 128
      %215 = vxpose.xlu0.b32.cont [11/16] 0.0, 128
      %216 = vxpose.xlu0.b32.cont [12/16] 0.0, 128
      %217 = vxpose.xlu0.b32.cont [13/16] 0.0, 128
      %218 = vxpose.xlu0.b32.cont [14/16] 0.0, 128
      %219 = vxpose.xlu0.b32.cont [15/16] 0.0, 128
      %220 = vxpose.xlu0.b32.end [16/16] 0.0, 128
      %v221 = vpop.trf.xlu0
      %v222 = vpop.trf.xlu0
      %v223 = vpop.trf.xlu0
      %v224 = vpop.trf.xlu0
      %v225 = vpop.trf.xlu0
      %v226 = vpop.trf.xlu0
      %v227 = vpop.trf.xlu0
      %v228 = vpop.trf.xlu0
      %v229 = vpop.trf.xlu0
      %v230 = vpop.trf.xlu0
      %v231 = vpop.trf.xlu0
      %v232 = vpop.trf.xlu0
      %v233 = vpop.trf.xlu0
      %v234 = vpop.trf.xlu0
      %v235 = vpop.trf.xlu0
      %v236 = vpop.trf.xlu0
      %237 = vxpose.xlu0.b32.start [1/16] %v203, 128
      %238 = vxpose.xlu0.b32.cont [2/16] 0.0, 128
      %239 = vxpose.xlu0.b32.cont [3/16] 0.0, 128
      %240 = vxpose.xlu0.b32.cont [4/16] 0.0, 128
      %241 = vxpose.xlu0.b32.cont [5/16] 0.0, 128
      %242 = vxpose.xlu0.b32.cont [6/16] 0.0, 128
      %243 = vxpose.xlu0.b32.cont [7/16] 0.0, 128
      %244 = vxpose.xlu0.b32.cont [8/16] 0.0, 128
      %245 = vxpose.xlu0.b32.cont [9/16] 0.0, 128
      %246 = vxpose.xlu0.b32.cont [10/16] 0.0, 128
      %247 = vxpose.xlu0.b32.cont [11/16] 0.0, 128
      %248 = vxpose.xlu0.b32.cont [12/16] 0.0, 128
      %249 = vxpose.xlu0.b32.cont [13/16] 0.0, 128
      %250 = vxpose.xlu0.b32.cont [14/16] 0.0, 128
      %251 = vxpose.xlu0.b32.cont [15/16] 0.0, 128
      %252 = vxpose.xlu0.b32.end [16/16] 0.0, 128
      %v253 = vpop.trf.xlu0
      %v254 = vpop.trf.xlu0
      %v255 = vpop.trf.xlu0
      %v256 = vpop.trf.xlu0
      %v257 = vpop.trf.xlu0
      %v258 = vpop.trf.xlu0
      %v259 = vpop.trf.xlu0
      %v260 = vpop.trf.xlu0
      %v261 = vpop.trf.xlu0
      %v262 = vpop.trf.xlu0
      %v263 = vpop.trf.xlu0
      %v264 = vpop.trf.xlu0
      %v265 = vpop.trf.xlu0
      %v266 = vpop.trf.xlu0
      %v267 = vpop.trf.xlu0
      %v268 = vpop.trf.xlu0
      %vm269 = vcmask 31744
      %v271 = vsel %vm269, %v221, 0
      %v274 = vsel %vm269, %v222, 0
      %v277 = vsel %vm269, %v223, 0
      %v280 = vsel %vm269, %v224, 0
      %v283 = vsel %vm269, %v225, 0
      %v286 = vsel %vm269, %v226, 0
      %v289 = vsel %vm269, %v227, 0
      %v292 = vsel %vm269, %v228, 0
      %v295 = vsel %vm269, %v229, 0
      %v298 = vsel %vm269, %v230, 0
      %v301 = vsel %vm269, %v231, 0
      %v304 = vsel %vm269, %v232, 0
      %v307 = vsel %vm269, %v233, 0
      %v310 = vsel %vm269, %v234, 0
      %v313 = vsel %vm269, %v235, 0
      %v316 = vsel %vm269, %v236, 0
      %v319 = vsel %vm269, %v253, 0
      %v322 = vsel %vm269, %v254, 0
      %v325 = vsel %vm269, %v255, 0
      %v328 = vsel %vm269, %v256, 0
      %v331 = vsel %vm269, %v257, 0
      %v334 = vsel %vm269, %v258, 0
      %v337 = vsel %vm269, %v259, 0
      %v340 = vsel %vm269, %v260, 0
      %v343 = vsel %vm269, %v261, 0
      %v346 = vsel %vm269, %v262, 0
      %v349 = vsel %vm269, %v263, 0
      %v352 = vsel %vm269, %v264, 0
      %v355 = vsel %vm269, %v265, 0
      %v358 = vsel %vm269, %v266, 0
      %v361 = vsel %vm269, %v267, 0
      %v364 = vsel %vm269, %v268, 0
      %vm366 = vcmask 1043456
      %v368 = vsel %vm366, %v204, 0
      %370 = vmatpush.msra.mxu0 0.0
      %371 = vmatpush.msra.mxu0 0.0
      %372 = vmatpush.msra.mxu0 0.0
      %373 = vmatpush.msra.mxu0 0.0
      %374 = vmatpush.msra.mxu0 0.0
      %375 = vmatpush.msra.mxu0 0.0
      %376 = vmatpush.msra.mxu0 0.0
      %377 = vmatpush.msra.mxu0 0.0
      %378 = vmatpush.msra.mxu0 0.0
      %379 = vmatpush.msra.mxu0 0.0
      %380 = vmatpush.msra.mxu0 0.0
      %381 = vmatpush.msra.mxu0 0.0
      %382 = vmatpush.msra.mxu0 0.0
      %383 = vmatpush.msra.mxu0 0.0
      %384 = vmatpush.msra.mxu0 0.0
      %385 = vmatpush.msra.mxu0 %v368
      %386 = vmatmul.f32.gmra.mxu0 %v271
      %v387 = vpop.f32.mrf.mxu0
      %v388 = vadd.f32 0.0, %v387
      %389 = vmatmul.f32.gmra.mxu0 %v274
      %v390 = vpop.f32.mrf.mxu0
      %v391 = vadd.f32 0.0, %v390
      %392 = vmatmul.f32.gmra.mxu0 %v277
      %v393 = vpop.f32.mrf.mxu0
      %v394 = vadd.f32 0.0, %v393
      %395 = vmatmul.f32.gmra.mxu0 %v280
      %v396 = vpop.f32.mrf.mxu0
      %v397 = vadd.f32 0.0, %v396
      %398 = vmatmul.f32.gmra.mxu0 %v283
      %v399 = vpop.f32.mrf.mxu0
      %v400 = vadd.f32 0.0, %v399
      %401 = vmatmul.f32.gmra.mxu0 %v286
      %v402 = vpop.f32.mrf.mxu0
      %v403 = vadd.f32 0.0, %v402
      %404 = vmatmul.f32.gmra.mxu0 %v289
      %v405 = vpop.f32.mrf.mxu0
      %v406 = vadd.f32 0.0, %v405
      %407 = vmatmul.f32.gmra.mxu0 %v292
      %v408 = vpop.f32.mrf.mxu0
      %v409 = vadd.f32 0.0, %v408
      %410 = vmatmul.f32.gmra.mxu0 %v295
      %v411 = vpop.f32.mrf.mxu0
      %v412 = vadd.f32 0.0, %v411
      %413 = vmatmul.f32.gmra.mxu0 %v298
      %v414 = vpop.f32.mrf.mxu0
      %v415 = vadd.f32 0.0, %v414
      %416 = vmatmul.f32.gmra.mxu0 %v301
      %v417 = vpop.f32.mrf.mxu0
      %v418 = vadd.f32 0.0, %v417
      %419 = vmatmul.f32.gmra.mxu0 %v304
      %v420 = vpop.f32.mrf.mxu0
      %v421 = vadd.f32 0.0, %v420
      %422 = vmatmul.f32.gmra.mxu0 %v307
      %v423 = vpop.f32.mrf.mxu0
      %v424 = vadd.f32 0.0, %v423
      %425 = vmatmul.f32.gmra.mxu0 %v310
      %v426 = vpop.f32.mrf.mxu0
      %v427 = vadd.f32 0.0, %v426
      %428 = vmatmul.f32.gmra.mxu0 %v313
      %v429 = vpop.f32.mrf.mxu0
      %v430 = vadd.f32 0.0, %v429
      %431 = vmatmul.f32.gmra.mxu0 %v316
      %v432 = vpop.f32.mrf.mxu0
      %v433 = vadd.f32 0.0, %v432
      %434 = vmatmul.f32.gmra.mxu0 %v319
      %v435 = vpop.f32.mrf.mxu0
      %v436 = vadd.f32 0.0, %v435
      %437 = vmatmul.f32.gmra.mxu0 %v322
      %v438 = vpop.f32.mrf.mxu0
      %v439 = vadd.f32 0.0, %v438
      %440 = vmatmul.f32.gmra.mxu0 %v325
      %v441 = vpop.f32.mrf.mxu0
      %v442 = vadd.f32 0.0, %v441
      %443 = vmatmul.f32.gmra.mxu0 %v328
      %v444 = vpop.f32.mrf.mxu0
      %v445 = vadd.f32 0.0, %v444
      %446 = vmatmul.f32.gmra.mxu0 %v331
      %v447 = vpop.f32.mrf.mxu0
      %v448 = vadd.f32 0.0, %v447
      %449 = vmatmul.f32.gmra.mxu0 %v334
      %v450 = vpop.f32.mrf.mxu0
      %v451 = vadd.f32 0.0, %v450
      %452 = vmatmul.f32.gmra.mxu0 %v337
      %v453 = vpop.f32.mrf.mxu0
      %v454 = vadd.f32 0.0, %v453
      %455 = vmatmul.f32.gmra.mxu0 %v340
      %v456 = vpop.f32.mrf.mxu0
      %v457 = vadd.f32 0.0, %v456
      %458 = vmatmul.f32.gmra.mxu0 %v343
      %v459 = vpop.f32.mrf.mxu0
      %v460 = vadd.f32 0.0, %v459
      %461 = vmatmul.f32.gmra.mxu0 %v346
      %v462 = vpop.f32.mrf.mxu0
      %v463 = vadd.f32 0.0, %v462
      %464 = vmatmul.f32.gmra.mxu0 %v349
      %v465 = vpop.f32.mrf.mxu0
      %v466 = vadd.f32 0.0, %v465
      %467 = vmatmul.f32.gmra.mxu0 %v352
      %v468 = vpop.f32.mrf.mxu0
      %v469 = vadd.f32 0.0, %v468
      %470 = vmatmul.f32.gmra.mxu0 %v355
      %v471 = vpop.f32.mrf.mxu0
      %v472 = vadd.f32 0.0, %v471
      %473 = vmatmul.f32.gmra.mxu0 %v358
      %v474 = vpop.f32.mrf.mxu0
      %v475 = vadd.f32 0.0, %v474
      %476 = vmatmul.f32.gmra.mxu0 %v361
      %v477 = vpop.f32.mrf.mxu0
      %v478 = vadd.f32 0.0, %v477
      %479 = vmatmul.f32.gmra.mxu0 %v364
      %v480 = vpop.f32.mrf.mxu0
      %v481 = vadd.f32 0.0, %v480
      %482 = vdwg.mxu0
      %v483 = vld [vmem:[%s185] sm:$0xff]
      %v484 = vld [vmem:[%s185 + $0x8] sm:$0xff]
      %v485 = vld [vmem:[%s185 + $0x10] sm:$0xff]
      %v486 = vld [vmem:[%s185 + $0x18] sm:$0xff]
      %v487 = vld [vmem:[%s185 + $0x20] sm:$0xff]
      %v488 = vld [vmem:[%s185 + $0x28] sm:$0xff]
      %v489 = vld [vmem:[%s185 + $0x30] sm:$0xff]
      %v490 = vld [vmem:[%s185 + $0x38] sm:$0xff]
      %v491 = vld [vmem:[%s185 + $0x40] sm:$0xff]
      %v492 = vld [vmem:[%s185 + $0x48] sm:$0xff]
      %v493 = vld [vmem:[%s185 + $0x50] sm:$0xff]
      %v494 = vld [vmem:[%s185 + $0x58] sm:$0xff]
      %v495 = vld [vmem:[%s185 + $0x60] sm:$0xff]
      %v496 = vld [vmem:[%s185 + $0x68] sm:$0xff]
      %v497 = vld [vmem:[%s185 + $0x70] sm:$0xff]
      %v498 = vld [vmem:[%s185 + $0x78] sm:$0xff]
      %v499 = vld [vmem:[%s185 + $0x80] sm:$0xff]
      %v500 = vld [vmem:[%s185 + $0x88] sm:$0xff]
      %v501 = vld [vmem:[%s185 + $0x90] sm:$0xff]
      %v502 = vld [vmem:[%s185 + $0x98] sm:$0xff]
      %v503 = vld [vmem:[%s185 + $0xa0] sm:$0xff]
      %v504 = vld [vmem:[%s185 + $0xa8] sm:$0xff]
      %v505 = vld [vmem:[%s185 + $0xb0] sm:$0xff]
      %v506 = vld [vmem:[%s185 + $0xb8] sm:$0xff]
      %v507 = vld [vmem:[%s185 + $0xc0] sm:$0xff]
      %v508 = vld [vmem:[%s185 + $0xc8] sm:$0xff]
      %v509 = vld [vmem:[%s185 + $0xd0] sm:$0xff]
      %v510 = vld [vmem:[%s185 + $0xd8] sm:$0xff]
      %v511 = vld [vmem:[%s185 + $0xe0] sm:$0xff]
      %v512 = vld [vmem:[%s185 + $0xe8] sm:$0xff]
      %v513 = vld [vmem:[%s185 + $0xf0] sm:$0xff]
      %v514 = vld [vmem:[%s185 + $0xf8] sm:$0xff]
      %v515 = vmul.f32 %v483, %v388
      %v516 = vmul.f32 %v484, %v391
      %v517 = vmul.f32 %v485, %v394
      %v518 = vmul.f32 %v486, %v397
      %v519 = vmul.f32 %v487, %v400
      %v520 = vmul.f32 %v488, %v403
      %v521 = vmul.f32 %v489, %v406
      %v522 = vmul.f32 %v490, %v409
      %v523 = vmul.f32 %v491, %v412
      %v524 = vmul.f32 %v492, %v415
      %v525 = vmul.f32 %v493, %v418
      %v526 = vmul.f32 %v494, %v421
      %v527 = vmul.f32 %v495, %v424
      %v528 = vmul.f32 %v496, %v427
      %v529 = vmul.f32 %v497, %v430
      %v530 = vmul.f32 %v498, %v433
      %v531 = vmul.f32 %v499, %v436
      %v532 = vmul.f32 %v500, %v439
      %v533 = vmul.f32 %v501, %v442
      %v534 = vmul.f32 %v502, %v445
      %v535 = vmul.f32 %v503, %v448
      %v536 = vmul.f32 %v504, %v451
      %v537 = vmul.f32 %v505, %v454
      %v538 = vmul.f32 %v506, %v457
      %v539 = vmul.f32 %v507, %v460
      %v540 = vmul.f32 %v508, %v463
      %v541 = vmul.f32 %v509, %v466
      %v542 = vmul.f32 %v510, %v469
      %v543 = vmul.f32 %v511, %v472
      %v544 = vmul.f32 %v512, %v475
      %v545 = vmul.f32 %v513, %v478
      %v546 = vmul.f32 %v514, %v481
      %547 = vst [vmem:[%s191] sm:$0xff] %v515
      %548 = vst [vmem:[%s191 + $0x8] sm:$0xff] %v516
      %549 = vst [vmem:[%s191 + $0x10] sm:$0xff] %v517
      %550 = vst [vmem:[%s191 + $0x18] sm:$0xff] %v518
      %551 = vst [vmem:[%s191 + $0x20] sm:$0xff] %v519
      %552 = vst [vmem:[%s191 + $0x28] sm:$0xff] %v520
      %553 = vst [vmem:[%s191 + $0x30] sm:$0xff] %v521
      %554 = vst [vmem:[%s191 + $0x38] sm:$0xff] %v522
      %555 = vst [vmem:[%s191 + $0x40] sm:$0xff] %v523
      %556 = vst [vmem:[%s191 + $0x48] sm:$0xff] %v524
      %557 = vst [vmem:[%s191 + $0x50] sm:$0xff] %v525
      %558 = vst [vmem:[%s191 + $0x58] sm:$0xff] %v526
      %559 = vst [vmem:[%s191 + $0x60] sm:$0xff] %v527
      %560 = vst [vmem:[%s191 + $0x68] sm:$0xff] %v528
      %561 = vst [vmem:[%s191 + $0x70] sm:$0xff] %v529
      %562 = vst [vmem:[%s191 + $0x78] sm:$0xff] %v530
      %563 = vst [vmem:[%s191 + $0x80] sm:$0xff] %v531
      %564 = vst [vmem:[%s191 + $0x88] sm:$0xff] %v532
      %565 = vst [vmem:[%s191 + $0x90] sm:$0xff] %v533
      %566 = vst [vmem:[%s191 + $0x98] sm:$0xff] %v534
      %567 = vst [vmem:[%s191 + $0xa0] sm:$0xff] %v535
      %568 = vst [vmem:[%s191 + $0xa8] sm:$0xff] %v536
      %569 = vst [vmem:[%s191 + $0xb0] sm:$0xff] %v537
      %570 = vst [vmem:[%s191 + $0xb8] sm:$0xff] %v538
      %571 = vst [vmem:[%s191 + $0xc0] sm:$0xff] %v539
      %572 = vst [vmem:[%s191 + $0xc8] sm:$0xff] %v540
      %573 = vst [vmem:[%s191 + $0xd0] sm:$0xff] %v541
      %574 = vst [vmem:[%s191 + $0xd8] sm:$0xff] %v542
      %575 = vst [vmem:[%s191 + $0xe0] sm:$0xff] %v543
      %576 = vst [vmem:[%s191 + $0xe8] sm:$0xff] %v544
      %577 = vst [vmem:[%s191 + $0xf0] sm:$0xff] %v545
      %578 = vst [vmem:[%s191 + $0xf8] sm:$0xff] %v546
      %s579 = smul.u32 32, %s14
      %p580 = scmp.lt.s32.totalorder %s579, 63
      %s581 = scalar_select %p580, %s579, 63
      %s582 = smul.addr %s581, 8
      %s583 = scalar_lea.vmem %s3, %s582
      // Predicated region
      $region33: #{context_forward.4} parent=31 // pred_check
        %p584 = pneg %p105
      $region34: #{context_forward.4} parent=31 // pred_check_branch
        %586 = sbr.rel (%p584) target = $region36
      $region35: #{context_forward.4} parent=31 // pred_region
        %s587 = smul.u32 32, %s14
      $region36: #{context_forward.4} parent=31 // pred_fallthru
        _
    $region32: #{context_forward.4} parent=5 // pred_fallthru
      _
    %p588 = scmp.le.s32.totalorder 2, %s9
    // Predicated region
    $region37: #{context_forward.4} parent=5 // pred_check
      %p589 = pneg %p588
    $region38: #{context_forward.4} parent=5 // pred_check_branch
      %591 = sbr.rel (%p589) target = $region40
    $region39: #{context_forward.4} parent=5 // pred_region
      %s592 = ssub.s32 %s9, 2
      // Predicated region
      $region41: #{context_forward.4} parent=39 // pred_check
        %p593 = pneg %p111
      $region42: #{context_forward.4} parent=39 // pred_check_branch
        %595 = sbr.rel (%p593) target = $region44
      $region43: #{context_forward.4} parent=39 // pred_region
        %s596 = smul.u32 32, %s15
        %p597 = scmp.lt.s32.totalorder %s596, 63
        %s598 = scalar_select %p597, %s596, 63
        %s599 = smul.addr %s598, 8
        %s600 = scalar_lea.vmem %s3, %s599
      $region44: #{context_forward.4} parent=39 // pred_fallthru
        _
    $region40: #{context_forward.4} parent=5 // pred_fallthru
      _
  $region6: #{context_forward.4} parent=0 // loop_footer
    %s13 = sadd.s32 1, %s9
  $region7: #{context_forward.4} parent=0 // loop_footer_branch
    %8 = sbr.rel target = $region3
  $region8: #{context_forward.4} parent=0 // loop_exit
    _

// kernel: context_forward.5
$region0: #{context_forward.5}
  #allocation0 [shape = 'u32[]', space=smem, size = 0x4, offset = 0x4, fixed_abs, tag = 'smem constant byte address 0x4 - core index']
  #allocation1 [shape = 'u32[72,128]{1,0:T(1,128)}', space=vmem, size = 0x9000, scoped, tag = 'internal scratch']
  %s0 = inlined_call_operand.vmem [shape: s32[1,1024], index: 0, kind: input, shape index: {}]
  %s1 = inlined_call_operand.vmem [shape: f32[4,128], index: 1, kind: input, shape index: {}]
  %s2 = inlined_call_operand.vmem [shape: f32[1024,128], index: 2, kind: input, shape index: {}, may-alias: {2,3}]
  %s3 = inlined_call_operand.vmem [shape: f32[1024,128], index: 3, kind: output, shape index: {}, may-alias: {2,3}]
  %s4 = sld [smem:[#allocation0]]
  $region45: #{context_forward.5} parent=0
    _
  %s6 = ssub.s32 1, %s4
  %s7 = scalar_select 0, %s6, %s4
  loop: start=0, step=1, limit=6
  $region2: #{context_forward.5} parent=0 // loop_pre_header
    _
  $region3: #{context_forward.5} parent=0 // loop_header
    %s9 = sphi 0, %s13
    %p10 = scmp.ge.s32.totalorder %s9, 6
    %s19 = sphi 0, %s21
    %s22 = sphi 0, %s19
    %s23 = sphi 0, %s22
    %s39 = sphi 0, %s23
    %s43 = sphi 0, %s43
    %s45 = sphi 0, %s43
    %s46 = sphi 0, %s45
    %s60 = sphi 0, %s46
    %s66 = sphi 0, %s68
    %s69 = sphi 0, %s66
    %s70 = sphi 0, %s69
    %s86 = sphi 0, %s70
    %s92 = sphi 0, %s94
    %s95 = sphi 0, %s92
    %s96 = sphi 0, %s95
    %s112 = sphi 0, %s96
  $region4: #{context_forward.5} parent=0 // loop_header_branch
    %12 = sbr.rel (%p10) target = $region8
  $region5: #{context_forward.5} parent=0 // loop_body
    %s14 = ssub.s32 %s9, 1
    %s15 = ssub.s32 %s9, 2
    %s16 = sadd.s32 %s9, 1
    %s17 = ssub.s32 %s9, %s16
    %p18 = scmp.eq.s32.totalorder %s17, 0
    %s20 = sadd.s32 %s19, 1
    %s21 = scalar_select %p18, %s19, %s20
    %p24 = pneg %p18
    %p25 = scmp.eq.s32.totalorder %s9, 3
    %p26 = por %p24, %p25
    %p27 = scmp.ne.s32.totalorder %s19, %s22
    %p28 = scmp.eq.s32.totalorder %s9, 0
    %p29 = por %p27, %p28
    %p30 = scmp.ne.s32.totalorder %s19, %s22
    %p31 = scmp.eq.s32.totalorder %s14, 3
    %p32 = por %p30, %p31
    %p33 = scmp.ne.s32.totalorder %s22, %s23
    %p34 = scmp.eq.s32.totalorder %s14, 0
    %p35 = por %p33, %p34
    %p36 = scmp.ne.s32.totalorder %s22, %s23
    %p37 = scmp.eq.s32.totalorder %s15, 3
    %p38 = por %p36, %p37
    %p40 = scmp.ne.s32.totalorder %s23, %s39
    %p41 = scmp.eq.s32.totalorder %s15, 0
    %p42 = por %p40, %p41
    %s44 = sadd.s32 %s43, 1
    %p47 = scmp.eq.s32.totalorder %s9, 3
    %p48 = scmp.ne.s32.totalorder %s43, %s45
    %p49 = scmp.eq.s32.totalorder %s9, 0
    %p50 = por %p48, %p49
    %p51 = scmp.ne.s32.totalorder %s43, %s45
    %p52 = scmp.eq.s32.totalorder %s14, 3
    %p53 = por %p51, %p52
    %p54 = scmp.ne.s32.totalorder %s45, %s46
    %p55 = scmp.eq.s32.totalorder %s14, 0
    %p56 = por %p54, %p55
    %p57 = scmp.ne.s32.totalorder %s45, %s46
    %p58 = scmp.eq.s32.totalorder %s15, 3
    %p59 = por %p57, %p58
    %p61 = scmp.ne.s32.totalorder %s46, %s60
    %p62 = scmp.eq.s32.totalorder %s15, 0
    %p63 = por %p61, %p62
    %s64 = ssub.s32 %s9, %s16
    %p65 = scmp.eq.s32.totalorder %s64, 0
    %s67 = sadd.s32 %s66, 1
    %s68 = scalar_select %p65, %s66, %s67
    %p71 = pneg %p65
    %p72 = scmp.eq.s32.totalorder %s9, 3
    %p73 = por %p71, %p72
    %p74 = scmp.ne.s32.totalorder %s66, %s69
    %p75 = scmp.eq.s32.totalorder %s9, 0
    %p76 = por %p74, %p75
    %p77 = scmp.ne.s32.totalorder %s66, %s69
    %p78 = scmp.eq.s32.totalorder %s14, 3
    %p79 = por %p77, %p78
    %p80 = scmp.ne.s32.totalorder %s69, %s70
    %p81 = scmp.eq.s32.totalorder %s14, 0
    %p82 = por %p80, %p81
    %p83 = scmp.ne.s32.totalorder %s69, %s70
    %p84 = scmp.eq.s32.totalorder %s15, 3
    %p85 = por %p83, %p84
    %p87 = scmp.ne.s32.totalorder %s70, %s86
    %p88 = scmp.eq.s32.totalorder %s15, 0
    %p89 = por %p87, %p88
    %s90 = ssub.s32 %s9, %s16
    %p91 = scmp.eq.s32.totalorder %s90, 0
    %s93 = sadd.s32 %s92, 1
    %s94 = scalar_select %p91, %s92, %s93
    %p97 = pneg %p91
    %p98 = scmp.eq.s32.totalorder %s9, 3
    %p99 = por %p97, %p98
    %p100 = scmp.ne.s32.totalorder %s92, %s95
    %p101 = scmp.eq.s32.totalorder %s9, 0
    %p102 = por %p100, %p101
    %p103 = scmp.ne.s32.totalorder %s92, %s95
    %p104 = scmp.eq.s32.totalorder %s14, 3
    %p105 = por %p103, %p104
    %p106 = scmp.ne.s32.totalorder %s95, %s96
    %p107 = scmp.eq.s32.totalorder %s14, 0
    %p108 = por %p106, %p107
    %p109 = scmp.ne.s32.totalorder %s95, %s96
    %p110 = scmp.eq.s32.totalorder %s15, 3
    %p111 = por %p109, %p110
    %p113 = scmp.ne.s32.totalorder %s96, %s112
    %p114 = scmp.eq.s32.totalorder %s15, 0
    %p115 = por %p113, %p114
    %p116 = scmp.le.s32.totalorder 1, %s9
    %p117 = scmp.lt.s32.totalorder %s9, 5
    %p118 = pnand %p116, %p117
    %p119 = pneg %p118
    // Predicated region
    $region9: #{context_forward.5} parent=5 // pred_check
      _
    $region10: #{context_forward.5} parent=5 // pred_check_branch
      %121 = sbr.rel (%p118) target = $region12
    $region11: #{context_forward.5} parent=5 // pred_region
      %s122 = ssub.s32 %s9, 1
      // Predicated region
      $region13: #{context_forward.5} parent=11 // pred_check
        %p123 = pneg %p56
      $region14: #{context_forward.5} parent=11 // pred_check_branch
        %125 = sbr.rel (%p123) target = $region16
      $region15: #{context_forward.5} parent=11 // pred_region
        _
      $region16: #{context_forward.5} parent=11 // pred_fallthru
        _
    $region12: #{context_forward.5} parent=5 // pred_fallthru
      _
    %p126 = scmp.lt.s32.totalorder %s9, 4
    // Predicated region
    $region17: #{context_forward.5} parent=5 // pred_check
      %p127 = pneg %p126
    $region18: #{context_forward.5} parent=5 // pred_check_branch
      %129 = sbr.rel (%p127) target = $region20
    $region19: #{context_forward.5} parent=5 // pred_region
      // Predicated region
      $region21: #{context_forward.5} parent=19 // pred_check
        %p130 = pneg %p29
      $region22: #{context_forward.5} parent=19 // pred_check_branch
        %132 = sbr.rel (%p130) target = $region24
      $region23: #{context_forward.5} parent=19 // pred_region
        %s133 = smul.u32 2, %s9
        %p134 = scmp.lt.s32.totalorder %s133, 7
        %s135 = scalar_select %p134, %s133, 7
        %s136 = scalar_lea.vmem %s0, %s135
        %s137 = smul.u32 2, %s9
      $region24: #{context_forward.5} parent=19 // pred_fallthru
        _
      // Predicated region
      $region25: #{context_forward.5} parent=19 // pred_check
        %p138 = pneg %p76
      $region26: #{context_forward.5} parent=19 // pred_check_branch
        %140 = sbr.rel (%p138) target = $region28
      $region27: #{context_forward.5} parent=19 // pred_region
        %s141 = smul.u32 32, %s9
        %p142 = scmp.lt.s32.totalorder %s141, 127
        %s143 = scalar_select %p142, %s141, 127
        %s144 = smul.addr %s143, 8
        %s145 = scalar_lea.vmem %s2, %s144
        %s146 = smul.u32 32, %s9
      $region28: #{context_forward.5} parent=19 // pred_fallthru
        _
    $region20: #{context_forward.5} parent=5 // pred_fallthru
      _
    %p147 = scmp.le.s32.totalorder 1, %s9
    %p148 = scmp.lt.s32.totalorder %s9, 5
    %p149 = pnand %p147, %p148
    %p150 = pneg %p149
    // Predicated region
    $region29: #{context_forward.5} parent=5 // pred_check
      _
    $region30: #{context_forward.5} parent=5 // pred_check_branch
      %152 = sbr.rel (%p149) target = $region32
    $region31: #{context_forward.5} parent=5 // pred_region
      %s153 = ssub.s32 %s9, 1
      %s154 = smul.u32 2, %s14
      %p155 = scmp.lt.s32.totalorder %s154, 7
      %s156 = scalar_select %p155, %s154, 7
      %s157 = scalar_lea.vmem %s0, %s156
      %p158 = pneg %p35
      %p159 = pneg %p32
      %p160 = pneg %p56
      %p161 = pneg %p53
      %s162 = smul.u32 32, %s14
      %p163 = scmp.lt.s32.totalorder %s162, 127
      %s164 = scalar_select %p163, %s162, 127
      %s165 = smul.addr %s164, 8
      %s166 = scalar_lea.vmem %s2, %s165
      %p167 = pneg %p82
      %p168 = pneg %p79
      %p169 = pneg %p108
      %p170 = pneg %p105
      %s171 = smul.u32 32, %s14
      %p172 = scmp.lt.s32.totalorder %s171, 127
      %s173 = scalar_select %p172, %s171, 127
      %s174 = smul.addr %s173, 8
      %s175 = scalar_lea.vmem %s3, %s174
      %s176 = smul.u32 2, %s14
      %p177 = scmp.lt.s32.totalorder %s176, 7
      %s178 = scalar_select %p177, %s176, 7
      %s179 = scalar_lea.vmem %s0, %s178
      %s180 = smul.u32 2, %s14
      %s181 = smul.u32 32, %s14
      %p182 = scmp.lt.s32.totalorder %s181, 127
      %s183 = scalar_select %p182, %s181, 127
      %s184 = smul.addr %s183, 8
      %s185 = scalar_lea.vmem %s2, %s184
      %s186 = smul.u32 32, %s14
      %s187 = smul.u32 32, %s14
      %p188 = scmp.lt.s32.totalorder %s187, 127
      %s189 = scalar_select %p188, %s187, 127
      %s190 = smul.addr %s189, 8
      %s191 = scalar_lea.vmem %s3, %s190
      %s192 = smul.u32 32, %s14
      %v193 = vld [vmem:[%s179] sm:$0x3]
      %v194 = vlaneseq
      %v195 = vshrl.u32 %v194, 7
      %v196 = vperm.slane %v193, 0
      %v197 = vperm.slane %v193, 1
      %vm198 = vcmp.eq.s32.totalorder %v196, %v195
      %vm199 = vcmp.eq.s32.totalorder %v197, %v195
      %v200 = vsel %vm198, 1, 0
      %v201 = vsel %vm199, 1, 0
      %v202 = vcvt.s32.f32 %v200
      %v203 = vcvt.s32.f32 %v201
      %v204 = vld [vmem:[%s1] sm:$0xf]
      %205 = vxpose.xlu0.b32.start [1/16] %v202, 128
      %206 = vxpose.xlu0.b32.cont [2/16] 0.0, 128
      %207 = vxpose.xlu0.b32.cont [3/16] 0.0, 128
      %208 = vxpose.xlu0.b32.cont [4/16] 0.0, 128
      %209 = vxpose.xlu0.b32.cont [5/16] 0.0, 128
      %210 = vxpose.xlu0.b32.cont [6/16] 0.0, 128
      %211 = vxpose.xlu0.b32.cont [7/16] 0.0, 128
      %212 = vxpose.xlu0.b32.cont [8/16] 0.0, 128
      %213 = vxpose.xlu0.b32.cont [9/16] 0.0, 128
      %214 = vxpose.xlu0.b32.cont [10/16] 0.0, 128
      %215 = vxpose.xlu0.b32.cont [11/16] 0.0, 128
      %216 = vxpose.xlu0.b32.cont [12/16] 0.0, 128
      %217 = vxpose.xlu0.b32.cont [13/16] 0.0, 128
      %218 = vxpose.xlu0.b32.cont [14/16] 0.0, 128
      %219 = vxpose.xlu0.b32.cont [15/16] 0.0, 128
      %220 = vxpose.xlu0.b32.end [16/16] 0.0, 128
      %v221 = vpop.trf.xlu0
      %v222 = vpop.trf.xlu0
      %v223 = vpop.trf.xlu0
      %v224 = vpop.trf.xlu0
      %v225 = vpop.trf.xlu0
      %v226 = vpop.trf.xlu0
      %v227 = vpop.trf.xlu0
      %v228 = vpop.trf.xlu0
      %v229 = vpop.trf.xlu0
      %v230 = vpop.trf.xlu0
      %v231 = vpop.trf.xlu0
      %v232 = vpop.trf.xlu0
      %v233 = vpop.trf.xlu0
      %v234 = vpop.trf.xlu0
      %v235 = vpop.trf.xlu0
      %v236 = vpop.trf.xlu0
      %237 = vxpose.xlu0.b32.start [1/16] %v203, 128
      %238 = vxpose.xlu0.b32.cont [2/16] 0.0, 128
      %239 = vxpose.xlu0.b32.cont [3/16] 0.0, 128
      %240 = vxpose.xlu0.b32.cont [4/16] 0.0, 128
      %241 = vxpose.xlu0.b32.cont [5/16] 0.0, 128
      %242 = vxpose.xlu0.b32.cont [6/16] 0.0, 128
      %243 = vxpose.xlu0.b32.cont [7/16] 0.0, 128
      %244 = vxpose.xlu0.b32.cont [8/16] 0.0, 128
      %245 = vxpose.xlu0.b32.cont [9/16] 0.0, 128
      %246 = vxpose.xlu0.b32.cont [10/16] 0.0, 128
      %247 = vxpose.xlu0.b32.cont [11/16] 0.0, 128
      %248 = vxpose.xlu0.b32.cont [12/16] 0.0, 128
      %249 = vxpose.xlu0.b32.cont [13/16] 0.0, 128
      %250 = vxpose.xlu0.b32.cont [14/16] 0.0, 128
      %251 = vxpose.xlu0.b32.cont [15/16] 0.0, 128
      %252 = vxpose.xlu0.b32.end [16/16] 0.0, 128
      %v253 = vpop.trf.xlu0
      %v254 = vpop.trf.xlu0
      %v255 = vpop.trf.xlu0
      %v256 = vpop.trf.xlu0
      %v257 = vpop.trf.xlu0
      %v258 = vpop.trf.xlu0
      %v259 = vpop.trf.xlu0
      %v260 = vpop.trf.xlu0
      %v261 = vpop.trf.xlu0
      %v262 = vpop.trf.xlu0
      %v263 = vpop.trf.xlu0
      %v264 = vpop.trf.xlu0
      %v265 = vpop.trf.xlu0
      %v266 = vpop.trf.xlu0
      %v267 = vpop.trf.xlu0
      %v268 = vpop.trf.xlu0
      %vm269 = vcmask 31744
      %v271 = vsel %vm269, %v221, 0
      %v274 = vsel %vm269, %v222, 0
      %v277 = vsel %vm269, %v223, 0
      %v280 = vsel %vm269, %v224, 0
      %v283 = vsel %vm269, %v225, 0
      %v286 = vsel %vm269, %v226, 0
      %v289 = vsel %vm269, %v227, 0
      %v292 = vsel %vm269, %v228, 0
      %v295 = vsel %vm269, %v229, 0
      %v298 = vsel %vm269, %v230, 0
      %v301 = vsel %vm269, %v231, 0
      %v304 = vsel %vm269, %v232, 0
      %v307 = vsel %vm269, %v233, 0
      %v310 = vsel %vm269, %v234, 0
      %v313 = vsel %vm269, %v235, 0
      %v316 = vsel %vm269, %v236, 0
      %v319 = vsel %vm269, %v253, 0
      %v322 = vsel %vm269, %v254, 0
      %v325 = vsel %vm269, %v255, 0
      %v328 = vsel %vm269, %v256, 0
      %v331 = vsel %vm269, %v257, 0
      %v334 = vsel %vm269, %v258, 0
      %v337 = vsel %vm269, %v259, 0
      %v340 = vsel %vm269, %v260, 0
      %v343 = vsel %vm269, %v261, 0
      %v346 = vsel %vm269, %v262, 0
      %v349 = vsel %vm269, %v263, 0
      %v352 = vsel %vm269, %v264, 0
      %v355 = vsel %vm269, %v265, 0
      %v358 = vsel %vm269, %v266, 0
      %v361 = vsel %vm269, %v267, 0
      %v364 = vsel %vm269, %v268, 0
      %vm366 = vcmask 1043456
      %v368 = vsel %vm366, %v204, 0
      %370 = vmatpush.msra.mxu0 0.0
      %371 = vmatpush.msra.mxu0 0.0
      %372 = vmatpush.msra.mxu0 0.0
      %373 = vmatpush.msra.mxu0 0.0
      %374 = vmatpush.msra.mxu0 0.0
      %375 = vmatpush.msra.mxu0 0.0
      %376 = vmatpush.msra.mxu0 0.0
      %377 = vmatpush.msra.mxu0 0.0
      %378 = vmatpush.msra.mxu0 0.0
      %379 = vmatpush.msra.mxu0 0.0
      %380 = vmatpush.msra.mxu0 0.0
      %381 = vmatpush.msra.mxu0 0.0
      %382 = vmatpush.msra.mxu0 0.0
      %383 = vmatpush.msra.mxu0 0.0
      %384 = vmatpush.msra.mxu0 0.0
      %385 = vmatpush.msra.mxu0 %v368
      %386 = vmatmul.f32.gmra.mxu0 %v271
      %v387 = vpop.f32.mrf.mxu0
      %v388 = vadd.f32 0.0, %v387
      %389 = vmatmul.f32.gmra.mxu0 %v274
      %v390 = vpop.f32.mrf.mxu0
      %v391 = vadd.f32 0.0, %v390
      %392 = vmatmul.f32.gmra.mxu0 %v277
      %v393 = vpop.f32.mrf.mxu0
      %v394 = vadd.f32 0.0, %v393
      %395 = vmatmul.f32.gmra.mxu0 %v280
      %v396 = vpop.f32.mrf.mxu0
      %v397 = vadd.f32 0.0, %v396
      %398 = vmatmul.f32.gmra.mxu0 %v283
      %v399 = vpop.f32.mrf.mxu0
      %v400 = vadd.f32 0.0, %v399
      %401 = vmatmul.f32.gmra.mxu0 %v286
      %v402 = vpop.f32.mrf.mxu0
      %v403 = vadd.f32 0.0, %v402
      %404 = vmatmul.f32.gmra.mxu0 %v289
      %v405 = vpop.f32.mrf.mxu0
      %v406 = vadd.f32 0.0, %v405
      %407 = vmatmul.f32.gmra.mxu0 %v292
      %v408 = vpop.f32.mrf.mxu0
      %v409 = vadd.f32 0.0, %v408
      %410 = vmatmul.f32.gmra.mxu0 %v295
      %v411 = vpop.f32.mrf.mxu0
      %v412 = vadd.f32 0.0, %v411
      %413 = vmatmul.f32.gmra.mxu0 %v298
      %v414 = vpop.f32.mrf.mxu0
      %v415 = vadd.f32 0.0, %v414
      %416 = vmatmul.f32.gmra.mxu0 %v301
      %v417 = vpop.f32.mrf.mxu0
      %v418 = vadd.f32 0.0, %v417
      %419 = vmatmul.f32.gmra.mxu0 %v304
      %v420 = vpop.f32.mrf.mxu0
      %v421 = vadd.f32 0.0, %v420
      %422 = vmatmul.f32.gmra.mxu0 %v307
      %v423 = vpop.f32.mrf.mxu0
      %v424 = vadd.f32 0.0, %v423
      %425 = vmatmul.f32.gmra.mxu0 %v310
      %v426 = vpop.f32.mrf.mxu0
      %v427 = vadd.f32 0.0, %v426
      %428 = vmatmul.f32.gmra.mxu0 %v313
      %v429 = vpop.f32.mrf.mxu0
      %v430 = vadd.f32 0.0, %v429
      %431 = vmatmul.f32.gmra.mxu0 %v316
      %v432 = vpop.f32.mrf.mxu0
      %v433 = vadd.f32 0.0, %v432
      %434 = vmatmul.f32.gmra.mxu0 %v319
      %v435 = vpop.f32.mrf.mxu0
      %v436 = vadd.f32 0.0, %v435
      %437 = vmatmul.f32.gmra.mxu0 %v322
      %v438 = vpop.f32.mrf.mxu0
      %v439 = vadd.f32 0.0, %v438
      %440 = vmatmul.f32.gmra.mxu0 %v325
      %v441 = vpop.f32.mrf.mxu0
      %v442 = vadd.f32 0.0, %v441
      %443 = vmatmul.f32.gmra.mxu0 %v328
      %v444 = vpop.f32.mrf.mxu0
      %v445 = vadd.f32 0.0, %v444
      %446 = vmatmul.f32.gmra.mxu0 %v331
      %v447 = vpop.f32.mrf.mxu0
      %v448 = vadd.f32 0.0, %v447
      %449 = vmatmul.f32.gmra.mxu0 %v334
      %v450 = vpop.f32.mrf.mxu0
      %v451 = vadd.f32 0.0, %v450
      %452 = vmatmul.f32.gmra.mxu0 %v337
      %v453 = vpop.f32.mrf.mxu0
      %v454 = vadd.f32 0.0, %v453
      %455 = vmatmul.f32.gmra.mxu0 %v340
      %v456 = vpop.f32.mrf.mxu0
      %v457 = vadd.f32 0.0, %v456
      %458 = vmatmul.f32.gmra.mxu0 %v343
      %v459 = vpop.f32.mrf.mxu0
      %v460 = vadd.f32 0.0, %v459
      %461 = vmatmul.f32.gmra.mxu0 %v346
      %v462 = vpop.f32.mrf.mxu0
      %v463 = vadd.f32 0.0, %v462
      %464 = vmatmul.f32.gmra.mxu0 %v349
      %v465 = vpop.f32.mrf.mxu0
      %v466 = vadd.f32 0.0, %v465
      %467 = vmatmul.f32.gmra.mxu0 %v352
      %v468 = vpop.f32.mrf.mxu0
      %v469 = vadd.f32 0.0, %v468
      %470 = vmatmul.f32.gmra.mxu0 %v355
      %v471 = vpop.f32.mrf.mxu0
      %v472 = vadd.f32 0.0, %v471
      %473 = vmatmul.f32.gmra.mxu0 %v358
      %v474 = vpop.f32.mrf.mxu0
      %v475 = vadd.f32 0.0, %v474
      %476 = vmatmul.f32.gmra.mxu0 %v361
      %v477 = vpop.f32.mrf.mxu0
      %v478 = vadd.f32 0.0, %v477
      %479 = vmatmul.f32.gmra.mxu0 %v364
      %v480 = vpop.f32.mrf.mxu0
      %v481 = vadd.f32 0.0, %v480
      %482 = vdwg.mxu0
      %v483 = vld [vmem:[%s185] sm:$0xff]
      %v484 = vld [vmem:[%s185 + $0x8] sm:$0xff]
      %v485 = vld [vmem:[%s185 + $0x10] sm:$0xff]
      %v486 = vld [vmem:[%s185 + $0x18] sm:$0xff]
      %v487 = vld [vmem:[%s185 + $0x20] sm:$0xff]
      %v488 = vld [vmem:[%s185 + $0x28] sm:$0xff]
      %v489 = vld [vmem:[%s185 + $0x30] sm:$0xff]
      %v490 = vld [vmem:[%s185 + $0x38] sm:$0xff]
      %v491 = vld [vmem:[%s185 + $0x40] sm:$0xff]
      %v492 = vld [vmem:[%s185 + $0x48] sm:$0xff]
      %v493 = vld [vmem:[%s185 + $0x50] sm:$0xff]
      %v494 = vld [vmem:[%s185 + $0x58] sm:$0xff]
      %v495 = vld [vmem:[%s185 + $0x60] sm:$0xff]
      %v496 = vld [vmem:[%s185 + $0x68] sm:$0xff]
      %v497 = vld [vmem:[%s185 + $0x70] sm:$0xff]
      %v498 = vld [vmem:[%s185 + $0x78] sm:$0xff]
      %v499 = vld [vmem:[%s185 + $0x80] sm:$0xff]
      %v500 = vld [vmem:[%s185 + $0x88] sm:$0xff]
      %v501 = vld [vmem:[%s185 + $0x90] sm:$0xff]
      %v502 = vld [vmem:[%s185 + $0x98] sm:$0xff]
      %v503 = vld [vmem:[%s185 + $0xa0] sm:$0xff]
      %v504 = vld [vmem:[%s185 + $0xa8] sm:$0xff]
      %v505 = vld [vmem:[%s185 + $0xb0] sm:$0xff]
      %v506 = vld [vmem:[%s185 + $0xb8] sm:$0xff]
      %v507 = vld [vmem:[%s185 + $0xc0] sm:$0xff]
      %v508 = vld [vmem:[%s185 + $0xc8] sm:$0xff]
      %v509 = vld [vmem:[%s185 + $0xd0] sm:$0xff]
      %v510 = vld [vmem:[%s185 + $0xd8] sm:$0xff]
      %v511 = vld [vmem:[%s185 + $0xe0] sm:$0xff]
      %v512 = vld [vmem:[%s185 + $0xe8] sm:$0xff]
      %v513 = vld [vmem:[%s185 + $0xf0] sm:$0xff]
      %v514 = vld [vmem:[%s185 + $0xf8] sm:$0xff]
      %v515 = vmul.f32 %v483, %v388
      %v516 = vmul.f32 %v484, %v391
      %v517 = vmul.f32 %v485, %v394
      %v518 = vmul.f32 %v486, %v397
      %v519 = vmul.f32 %v487, %v400
      %v520 = vmul.f32 %v488, %v403
      %v521 = vmul.f32 %v489, %v406
      %v522 = vmul.f32 %v490, %v409
      %v523 = vmul.f32 %v491, %v412
      %v524 = vmul.f32 %v492, %v415
      %v525 = vmul.f32 %v493, %v418
      %v526 = vmul.f32 %v494, %v421
      %v527 = vmul.f32 %v495, %v424
      %v528 = vmul.f32 %v496, %v427
      %v529 = vmul.f32 %v497, %v430
      %v530 = vmul.f32 %v498, %v433
      %v531 = vmul.f32 %v499, %v436
      %v532 = vmul.f32 %v500, %v439
      %v533 = vmul.f32 %v501, %v442
      %v534 = vmul.f32 %v502, %v445
      %v535 = vmul.f32 %v503, %v448
      %v536 = vmul.f32 %v504, %v451
      %v537 = vmul.f32 %v505, %v454
      %v538 = vmul.f32 %v506, %v457
      %v539 = vmul.f32 %v507, %v460
      %v540 = vmul.f32 %v508, %v463
      %v541 = vmul.f32 %v509, %v466
      %v542 = vmul.f32 %v510, %v469
      %v543 = vmul.f32 %v511, %v472
      %v544 = vmul.f32 %v512, %v475
      %v545 = vmul.f32 %v513, %v478
      %v546 = vmul.f32 %v514, %v481
      %547 = vst [vmem:[%s191] sm:$0xff] %v515
      %548 = vst [vmem:[%s191 + $0x8] sm:$0xff] %v516
      %549 = vst [vmem:[%s191 + $0x10] sm:$0xff] %v517
      %550 = vst [vmem:[%s191 + $0x18] sm:$0xff] %v518
      %551 = vst [vmem:[%s191 + $0x20] sm:$0xff] %v519
      %552 = vst [vmem:[%s191 + $0x28] sm:$0xff] %v520
      %553 = vst [vmem:[%s191 + $0x30] sm:$0xff] %v521
      %554 = vst [vmem:[%s191 + $0x38] sm:$0xff] %v522
      %555 = vst [vmem:[%s191 + $0x40] sm:$0xff] %v523
      %556 = vst [vmem:[%s191 + $0x48] sm:$0xff] %v524
      %557 = vst [vmem:[%s191 + $0x50] sm:$0xff] %v525
      %558 = vst [vmem:[%s191 + $0x58] sm:$0xff] %v526
      %559 = vst [vmem:[%s191 + $0x60] sm:$0xff] %v527
      %560 = vst [vmem:[%s191 + $0x68] sm:$0xff] %v528
      %561 = vst [vmem:[%s191 + $0x70] sm:$0xff] %v529
      %562 = vst [vmem:[%s191 + $0x78] sm:$0xff] %v530
      %563 = vst [vmem:[%s191 + $0x80] sm:$0xff] %v531
      %564 = vst [vmem:[%s191 + $0x88] sm:$0xff] %v532
      %565 = vst [vmem:[%s191 + $0x90] sm:$0xff] %v533
      %566 = vst [vmem:[%s191 + $0x98] sm:$0xff] %v534
      %567 = vst [vmem:[%s191 + $0xa0] sm:$0xff] %v535
      %568 = vst [vmem:[%s191 + $0xa8] sm:$0xff] %v536
      %569 = vst [vmem:[%s191 + $0xb0] sm:$0xff] %v537
      %570 = vst [vmem:[%s191 + $0xb8] sm:$0xff] %v538
      %571 = vst [vmem:[%s191 + $0xc0] sm:$0xff] %v539
      %572 = vst [vmem:[%s191 + $0xc8] sm:$0xff] %v540
      %573 = vst [vmem:[%s191 + $0xd0] sm:$0xff] %v541
      %574 = vst [vmem:[%s191 + $0xd8] sm:$0xff] %v542
      %575 = vst [vmem:[%s191 + $0xe0] sm:$0xff] %v543
      %576 = vst [vmem:[%s191 + $0xe8] sm:$0xff] %v544
      %577 = vst [vmem:[%s191 + $0xf0] sm:$0xff] %v545
      %578 = vst [vmem:[%s191 + $0xf8] sm:$0xff] %v546
      %s579 = smul.u32 32, %s14
      %p580 = scmp.lt.s32.totalorder %s579, 127
      %s581 = scalar_select %p580, %s579, 127
      %s582 = smul.addr %s581, 8
      %s583 = scalar_lea.vmem %s3, %s582
      // Predicated region
      $region33: #{context_forward.5} parent=31 // pred_check
        %p584 = pneg %p105
      $region34: #{context_forward.5} parent=31 // pred_check_branch
        %586 = sbr.rel (%p584) target = $region36
      $region35: #{context_forward.5} parent=31 // pred_region
        %s587 = smul.u32 32, %s14
      $region36: #{context_forward.5} parent=31 // pred_fallthru
        _
    $region32: #{context_forward.5} parent=5 // pred_fallthru
      _
    %p588 = scmp.le.s32.totalorder 2, %s9
    // Predicated region
    $region37: #{context_forward.5} parent=5 // pred_check
      %p589 = pneg %p588
    $region38: #{context_forward.5} parent=5 // pred_check_branch
      %591 = sbr.rel (%p589) target = $region40
    $region39: #{context_forward.5} parent=5 // pred_region
      %s592 = ssub.s32 %s9, 2
      // Predicated region
      $region41: #{context_forward.5} parent=39 // pred_check
        %p593 = pneg %p111
      $region42: #{context_forward.5} parent=39 // pred_check_branch
        %595 = sbr.rel (%p593) target = $region44
      $region43: #{context_forward.5} parent=39 // pred_region
        %s596 = smul.u32 32, %s15
        %p597 = scmp.lt.s32.totalorder %s596, 127
        %s598 = scalar_select %p597, %s596, 127
        %s599 = smul.addr %s598, 8
        %s600 = scalar_lea.vmem %s3, %s599
      $region44: #{context_forward.5} parent=39 // pred_fallthru
        _
    $region40: #{context_forward.5} parent=5 // pred_fallthru
      _
  $region6: #{context_forward.5} parent=0 // loop_footer
    %s13 = sadd.s32 1, %s9
  $region7: #{context_forward.5} parent=0 // loop_footer_branch
    %8 = sbr.rel target = $region3
  $region8: #{context_forward.5} parent=0 // loop_exit
    _

// kernel: context_forward.3
$region0: #{context_forward.3}
  #allocation0 [shape = 'u32[]', space=smem, size = 0x4, offset = 0x4, fixed_abs, tag = 'smem constant byte address 0x4 - core index']
  #allocation1 [shape = 'u32[72,128]{1,0:T(1,128)}', space=vmem, size = 0x9000, scoped, tag = 'internal scratch']
  #allocation2 [shape = 'f32[4,128]{1,0:T(4,128)}', space=vmem, size = 0x800, scoped, tag = 'scratch operand']
  #allocation3 [shape = 'f32[4,1]{1,0:T(4,128)}', space=vmem, size = 0x800, scoped, tag = 'scratch operand']
  %s0 = inlined_call_operand.vmem [shape: s32[1,512], index: 0, kind: input, shape index: {}]
  %s1 = inlined_call_operand.vmem [shape: f32[512,128], index: 1, kind: input, shape index: {}]
  %s2 = inlined_call_operand.vmem [shape: f32[128,128], index: 2, kind: input, shape index: {}]
  %s3 = inlined_call_operand.vmem [shape: f32[1,128], index: 3, kind: input, shape index: {}]
  %s4 = inlined_call_operand.vmem [shape: f32[128,128], index: 4, kind: input, shape index: {}]
  %s5 = inlined_call_operand.vmem [shape: f32[1,128], index: 5, kind: input, shape index: {}]
  %s6 = inlined_call_operand.vmem [shape: f32[128,128], index: 6, kind: input, shape index: {}]
  %s7 = inlined_call_operand.vmem [shape: f32[1,128], index: 7, kind: input, shape index: {}]
  %s8 = inlined_call_operand.vmem [shape: f32[128,128], index: 8, kind: input, shape index: {}]
  %s9 = inlined_call_operand.vmem [shape: f32[1,128], index: 9, kind: input, shape index: {}]
  %s10 = inlined_call_operand.vmem [shape: f32[128,128], index: 10, kind: input, shape index: {}]
  %s11 = inlined_call_operand.vmem [shape: f32[1,128], index: 11, kind: input, shape index: {}]
  %s12 = inlined_call_operand.vmem [shape: f32[128,128], index: 12, kind: input, shape index: {}]
  %s13 = inlined_call_operand.vmem [shape: f32[1,128], index: 13, kind: input, shape index: {}]
  %s14 = inlined_call_operand.vmem [shape: f32[4,128], index: 14, kind: output, shape index: {0}]
  %s15 = inlined_call_operand.vmem [shape: f32[4,128], index: 15, kind: output, shape index: {1}]
  %16 = xla_tuple %s14, %s15
  %s17 = sld [smem:[#allocation0]]
  $region105: #{context_forward.3} parent=0
    _
  %s19 = ssub.s32 1, %s17
  %s20 = scalar_select 0, %s19, %s17
  loop: start=0, step=1, limit=4
  $region2: #{context_forward.3} parent=0 // loop_pre_header
    _
  $region3: #{context_forward.3} parent=0 // loop_header
    %s22 = sphi 0, %s26
    %p23 = scmp.ge.s32.totalorder %s22, 4
    %s32 = sphi 0, %s34
    %s35 = sphi 0, %s32
    %s36 = sphi 0, %s35
    %s52 = sphi 0, %s36
    %s58 = sphi 0, %s60
    %s61 = sphi 0, %s58
    %s62 = sphi 0, %s61
    %s78 = sphi 0, %s62
    %s82 = sphi 0, %s82
    %s84 = sphi 0, %s82
    %s85 = sphi 0, %s84
    %s99 = sphi 0, %s85
    %s103 = sphi 0, %s103
    %s105 = sphi 0, %s103
    %s106 = sphi 0, %s105
    %s120 = sphi 0, %s106
    %s124 = sphi 0, %s124
    %s126 = sphi 0, %s124
    %s127 = sphi 0, %s126
    %s141 = sphi 0, %s127
    %s145 = sphi 0, %s145
    %s147 = sphi 0, %s145
    %s148 = sphi 0, %s147
    %s162 = sphi 0, %s148
    %s166 = sphi 0, %s166
    %s168 = sphi 0, %s166
    %s169 = sphi 0, %s168
    %s183 = sphi 0, %s169
    %s187 = sphi 0, %s187
    %s189 = sphi 0, %s187
    %s190 = sphi 0, %s189
    %s204 = sphi 0, %s190
    %s208 = sphi 0, %s208
    %s210 = sphi 0, %s208
    %s211 = sphi 0, %s210
    %s225 = sphi 0, %s211
    %s229 = sphi 0, %s229
    %s231 = sphi 0, %s229
    %s232 = sphi 0, %s231
    %s246 = sphi 0, %s232
    %s250 = sphi 0, %s250
    %s252 = sphi 0, %s250
    %s253 = sphi 0, %s252
    %s267 = sphi 0, %s253
    %s271 = sphi 0, %s271
    %s273 = sphi 0, %s271
    %s274 = sphi 0, %s273
    %s288 = sphi 0, %s274
    %s292 = sphi 0, %s292
    %s294 = sphi 0, %s292
    %s295 = sphi 0, %s294
    %s309 = sphi 0, %s295
    %s313 = sphi 0, %s313
    %s315 = sphi 0, %s313
    %s316 = sphi 0, %s315
    %s330 = sphi 0, %s316
    %s334 = sphi 0, %s334
    %s336 = sphi 0, %s334
    %s337 = sphi 0, %s336
    %s351 = sphi 0, %s337
    %s355 = sphi 0, %s355
    %s357 = sphi 0, %s355
    %s358 = sphi 0, %s357
    %s372 = sphi 0, %s358
  $region4: #{context_forward.3} parent=0 // loop_header_branch
    %25 = sbr.rel (%p23) target = $region8
  $region5: #{context_forward.3} parent=0 // loop_body
    %s27 = ssub.s32 %s22, 1
    %s28 = ssub.s32 %s22, 2
    %s29 = sadd.s32 %s22, 1
    %s30 = ssub.s32 %s22, %s29
    %p31 = scmp.eq.s32.totalorder %s30, 0
    %s33 = sadd.s32 %s32, 1
    %s34 = scalar_select %p31, %s32, %s33
    %p37 = pneg %p31
    %p38 = scmp.eq.s32.totalorder %s22, 1
    %p39 = por %p37, %p38
    %p40 = scmp.ne.s32.totalorder %s32, %s35
    %p41 = scmp.eq.s32.totalorder %s22, 0
    %p42 = por %p40, %p41
    %p43 = scmp.ne.s32.totalorder %s32, %s35
    %p44 = scmp.eq.s32.totalorder %s27, 1
    %p45 = por %p43, %p44
    %p46 = scmp.ne.s32.totalorder %s35, %s36
    %p47 = scmp.eq.s32.totalorder %s27, 0
    %p48 = por %p46, %p47
    %p49 = scmp.ne.s32.totalorder %s35, %s36
    %p50 = scmp.eq.s32.totalorder %s28, 1
    %p51 = por %p49, %p50
    %p53 = scmp.ne.s32.totalorder %s36, %s52
    %p54 = scmp.eq.s32.totalorder %s28, 0
    %p55 = por %p53, %p54
    %s56 = ssub.s32 %s22, %s29
    %p57 = scmp.eq.s32.totalorder %s56, 0
    %s59 = sadd.s32 %s58, 1
    %s60 = scalar_select %p57, %s58, %s59
    %p63 = pneg %p57
    %p64 = scmp.eq.s32.totalorder %s22, 1
    %p65 = por %p63, %p64
    %p66 = scmp.ne.s32.totalorder %s58, %s61
    %p67 = scmp.eq.s32.totalorder %s22, 0
    %p68 = por %p66, %p67
    %p69 = scmp.ne.s32.totalorder %s58, %s61
    %p70 = scmp.eq.s32.totalorder %s27, 1
    %p71 = por %p69, %p70
    %p72 = scmp.ne.s32.totalorder %s61, %s62
    %p73 = scmp.eq.s32.totalorder %s27, 0
    %p74 = por %p72, %p73
    %p75 = scmp.ne.s32.totalorder %s61, %s62
    %p76 = scmp.eq.s32.totalorder %s28, 1
    %p77 = por %p75, %p76
    %p79 = scmp.ne.s32.totalorder %s62, %s78
    %p80 = scmp.eq.s32.totalorder %s28, 0
    %p81 = por %p79, %p80
    %s83 = sadd.s32 %s82, 1
    %p86 = scmp.eq.s32.totalorder %s22, 1
    %p87 = scmp.ne.s32.totalorder %s82, %s84
    %p88 = scmp.eq.s32.totalorder %s22, 0
    %p89 = por %p87, %p88
    %p90 = scmp.ne.s32.totalorder %s82, %s84
    %p91 = scmp.eq.s32.totalorder %s27, 1
    %p92 = por %p90, %p91
    %p93 = scmp.ne.s32.totalorder %s84, %s85
    %p94 = scmp.eq.s32.totalorder %s27, 0
    %p95 = por %p93, %p94
    %p96 = scmp.ne.s32.totalorder %s84, %s85
    %p97 = scmp.eq.s32.totalorder %s28, 1
    %p98 = por %p96, %p97
    %p100 = scmp.ne.s32.totalorder %s85, %s99
    %p101 = scmp.eq.s32.totalorder %s28, 0
    %p102 = por %p100, %p101
    %s104 = sadd.s32 %s103, 1
    %p107 = scmp.eq.s32.totalorder %s22, 1
    %p108 = scmp.ne.s32.totalorder %s103, %s105
    %p109 = scmp.eq.s32.totalorder %s22, 0
    %p110 = por %p108, %p109
    %p111 = scmp.ne.s32.totalorder %s103, %s105
    %p112 = scmp.eq.s32.totalorder %s27, 1
    %p113 = por %p111, %p112
    %p114 = scmp.ne.s32.totalorder %s105, %s106
    %p115 = scmp.eq.s32.totalorder %s27, 0
    %p116 = por %p114, %p115
    %p117 = scmp.ne.s32.totalorder %s105, %s106
    %p118 = scmp.eq.s32.totalorder %s28, 1
    %p119 = por %p117, %p118
    %p121 = scmp.ne.s32.totalorder %s106, %s120
    %p122 = scmp.eq.s32.totalorder %s28, 0
    %p123 = por %p121, %p122
    %s125 = sadd.s32 %s124, 1
    %p128 = scmp.eq.s32.totalorder %s22, 1
    %p129 = scmp.ne.s32.totalorder %s124, %s126
    %p130 = scmp.eq.s32.totalorder %s22, 0
    %p131 = por %p129, %p130
    %p132 = scmp.ne.s32.totalorder %s124, %s126
    %p133 = scmp.eq.s32.totalorder %s27, 1
    %p134 = por %p132, %p133
    %p135 = scmp.ne.s32.totalorder %s126, %s127
    %p136 = scmp.eq.s32.totalorder %s27, 0
    %p137 = por %p135, %p136
    %p138 = scmp.ne.s32.totalorder %s126, %s127
    %p139 = scmp.eq.s32.totalorder %s28, 1
    %p140 = por %p138, %p139
    %p142 = scmp.ne.s32.totalorder %s127, %s141
    %p143 = scmp.eq.s32.totalorder %s28, 0
    %p144 = por %p142, %p143
    %s146 = sadd.s32 %s145, 1
    %p149 = scmp.eq.s32.totalorder %s22, 1
    %p150 = scmp.ne.s32.totalorder %s145, %s147
    %p151 = scmp.eq.s32.totalorder %s22, 0
    %p152 = por %p150, %p151
    %p153 = scmp.ne.s32.totalorder %s145, %s147
    %p154 = scmp.eq.s32.totalorder %s27, 1
    %p155 = por %p153, %p154
    %p156 = scmp.ne.s32.totalorder %s147, %s148
    %p157 = scmp.eq.s32.totalorder %s27, 0
    %p158 = por %p156, %p157
    %p159 = scmp.ne.s32.totalorder %s147, %s148
    %p160 = scmp.eq.s32.totalorder %s28, 1
    %p161 = por %p159, %p160
    %p163 = scmp.ne.s32.totalorder %s148, %s162
    %p164 = scmp.eq.s32.totalorder %s28, 0
    %p165 = por %p163, %p164
    %s167 = sadd.s32 %s166, 1
    %p170 = scmp.eq.s32.totalorder %s22, 1
    %p171 = scmp.ne.s32.totalorder %s166, %s168
    %p172 = scmp.eq.s32.totalorder %s22, 0
    %p173 = por %p171, %p172
    %p174 = scmp.ne.s32.totalorder %s166, %s168
    %p175 = scmp.eq.s32.totalorder %s27, 1
    %p176 = por %p174, %p175
    %p177 = scmp.ne.s32.totalorder %s168, %s169
    %p178 = scmp.eq.s32.totalorder %s27, 0
    %p179 = por %p177, %p178
    %p180 = scmp.ne.s32.totalorder %s168, %s169
    %p181 = scmp.eq.s32.totalorder %s28, 1
    %p182 = por %p180, %p181
    %p184 = scmp.ne.s32.totalorder %s169, %s183
    %p185 = scmp.eq.s32.totalorder %s28, 0
    %p186 = por %p184, %p185
    %s188 = sadd.s32 %s187, 1
    %p191 = scmp.eq.s32.totalorder %s22, 1
    %p192 = scmp.ne.s32.totalorder %s187, %s189
    %p193 = scmp.eq.s32.totalorder %s22, 0
    %p194 = por %p192, %p193
    %p195 = scmp.ne.s32.totalorder %s187, %s189
    %p196 = scmp.eq.s32.totalorder %s27, 1
    %p197 = por %p195, %p196
    %p198 = scmp.ne.s32.totalorder %s189, %s190
    %p199 = scmp.eq.s32.totalorder %s27, 0
    %p200 = por %p198, %p199
    %p201 = scmp.ne.s32.totalorder %s189, %s190
    %p202 = scmp.eq.s32.totalorder %s28, 1
    %p203 = por %p201, %p202
    %p205 = scmp.ne.s32.totalorder %s190, %s204
    %p206 = scmp.eq.s32.totalorder %s28, 0
    %p207 = por %p205, %p206
    %s209 = sadd.s32 %s208, 1
    %p212 = scmp.eq.s32.totalorder %s22, 1
    %p213 = scmp.ne.s32.totalorder %s208, %s210
    %p214 = scmp.eq.s32.totalorder %s22, 0
    %p215 = por %p213, %p214
    %p216 = scmp.ne.s32.totalorder %s208, %s210
    %p217 = scmp.eq.s32.totalorder %s27, 1
    %p218 = por %p216, %p217
    %p219 = scmp.ne.s32.totalorder %s210, %s211
    %p220 = scmp.eq.s32.totalorder %s27, 0
    %p221 = por %p219, %p220
    %p222 = scmp.ne.s32.totalorder %s210, %s211
    %p223 = scmp.eq.s32.totalorder %s28, 1
    %p224 = por %p222, %p223
    %p226 = scmp.ne.s32.totalorder %s211, %s225
    %p227 = scmp.eq.s32.totalorder %s28, 0
    %p228 = por %p226, %p227
    %s230 = sadd.s32 %s229, 1
    %p233 = scmp.eq.s32.totalorder %s22, 1
    %p234 = scmp.ne.s32.totalorder %s229, %s231
    %p235 = scmp.eq.s32.totalorder %s22, 0
    %p236 = por %p234, %p235
    %p237 = scmp.ne.s32.totalorder %s229, %s231
    %p238 = scmp.eq.s32.totalorder %s27, 1
    %p239 = por %p237, %p238
    %p240 = scmp.ne.s32.totalorder %s231, %s232
    %p241 = scmp.eq.s32.totalorder %s27, 0
    %p242 = por %p240, %p241
    %p243 = scmp.ne.s32.totalorder %s231, %s232
    %p244 = scmp.eq.s32.totalorder %s28, 1
    %p245 = por %p243, %p244
    %p247 = scmp.ne.s32.totalorder %s232, %s246
    %p248 = scmp.eq.s32.totalorder %s28, 0
    %p249 = por %p247, %p248
    %s251 = sadd.s32 %s250, 1
    %p254 = scmp.eq.s32.totalorder %s22, 1
    %p255 = scmp.ne.s32.totalorder %s250, %s252
    %p256 = scmp.eq.s32.totalorder %s22, 0
    %p257 = por %p255, %p256
    %p258 = scmp.ne.s32.totalorder %s250, %s252
    %p259 = scmp.eq.s32.totalorder %s27, 1
    %p260 = por %p258, %p259
    %p261 = scmp.ne.s32.totalorder %s252, %s253
    %p262 = scmp.eq.s32.totalorder %s27, 0
    %p263 = por %p261, %p262
    %p264 = scmp.ne.s32.totalorder %s252, %s253
    %p265 = scmp.eq.s32.totalorder %s28, 1
    %p266 = por %p264, %p265
    %p268 = scmp.ne.s32.totalorder %s253, %s267
    %p269 = scmp.eq.s32.totalorder %s28, 0
    %p270 = por %p268, %p269
    %s272 = sadd.s32 %s271, 1
    %p275 = scmp.eq.s32.totalorder %s22, 1
    %p276 = scmp.ne.s32.totalorder %s271, %s273
    %p277 = scmp.eq.s32.totalorder %s22, 0
    %p278 = por %p276, %p277
    %p279 = scmp.ne.s32.totalorder %s271, %s273
    %p280 = scmp.eq.s32.totalorder %s27, 1
    %p281 = por %p279, %p280
    %p282 = scmp.ne.s32.totalorder %s273, %s274
    %p283 = scmp.eq.s32.totalorder %s27, 0
    %p284 = por %p282, %p283
    %p285 = scmp.ne.s32.totalorder %s273, %s274
    %p286 = scmp.eq.s32.totalorder %s28, 1
    %p287 = por %p285, %p286
    %p289 = scmp.ne.s32.totalorder %s274, %s288
    %p290 = scmp.eq.s32.totalorder %s28, 0
    %p291 = por %p289, %p290
    %s293 = sadd.s32 %s292, 1
    %p296 = scmp.eq.s32.totalorder %s22, 1
    %p297 = scmp.ne.s32.totalorder %s292, %s294
    %p298 = scmp.eq.s32.totalorder %s22, 0
    %p299 = por %p297, %p298
    %p300 = scmp.ne.s32.totalorder %s292, %s294
    %p301 = scmp.eq.s32.totalorder %s27, 1
    %p302 = por %p300, %p301
    %p303 = scmp.ne.s32.totalorder %s294, %s295
    %p304 = scmp.eq.s32.totalorder %s27, 0
    %p305 = por %p303, %p304
    %p306 = scmp.ne.s32.totalorder %s294, %s295
    %p307 = scmp.eq.s32.totalorder %s28, 1
    %p308 = por %p306, %p307
    %p310 = scmp.ne.s32.totalorder %s295, %s309
    %p311 = scmp.eq.s32.totalorder %s28, 0
    %p312 = por %p310, %p311
    %s314 = sadd.s32 %s313, 1
    %p317 = scmp.eq.s32.totalorder %s22, 1
    %p318 = scmp.ne.s32.totalorder %s313, %s315
    %p319 = scmp.eq.s32.totalorder %s22, 0
    %p320 = por %p318, %p319
    %p321 = scmp.ne.s32.totalorder %s313, %s315
    %p322 = scmp.eq.s32.totalorder %s27, 1
    %p323 = por %p321, %p322
    %p324 = scmp.ne.s32.totalorder %s315, %s316
    %p325 = scmp.eq.s32.totalorder %s27, 0
    %p326 = por %p324, %p325
    %p327 = scmp.ne.s32.totalorder %s315, %s316
    %p328 = scmp.eq.s32.totalorder %s28, 1
    %p329 = por %p327, %p328
    %p331 = scmp.ne.s32.totalorder %s316, %s330
    %p332 = scmp.eq.s32.totalorder %s28, 0
    %p333 = por %p331, %p332
    %s335 = sadd.s32 %s334, 1
    %p338 = scmp.eq.s32.totalorder %s22, 1
    %p339 = scmp.ne.s32.totalorder %s334, %s336
    %p340 = scmp.eq.s32.totalorder %s22, 0
    %p341 = por %p339, %p340
    %p342 = scmp.ne.s32.totalorder %s334, %s336
    %p343 = scmp.eq.s32.totalorder %s27, 1
    %p344 = por %p342, %p343
    %p345 = scmp.ne.s32.totalorder %s336, %s337
    %p346 = scmp.eq.s32.totalorder %s27, 0
    %p347 = por %p345, %p346
    %p348 = scmp.ne.s32.totalorder %s336, %s337
    %p349 = scmp.eq.s32.totalorder %s28, 1
    %p350 = por %p348, %p349
    %p352 = scmp.ne.s32.totalorder %s337, %s351
    %p353 = scmp.eq.s32.totalorder %s28, 0
    %p354 = por %p352, %p353
    %s356 = sadd.s32 %s355, 1
    %p359 = scmp.eq.s32.totalorder %s22, 1
    %p360 = scmp.ne.s32.totalorder %s355, %s357
    %p361 = scmp.eq.s32.totalorder %s22, 0
    %p362 = por %p360, %p361
    %p363 = scmp.ne.s32.totalorder %s355, %s357
    %p364 = scmp.eq.s32.totalorder %s27, 1
    %p365 = por %p363, %p364
    %p366 = scmp.ne.s32.totalorder %s357, %s358
    %p367 = scmp.eq.s32.totalorder %s27, 0
    %p368 = por %p366, %p367
    %p369 = scmp.ne.s32.totalorder %s357, %s358
    %p370 = scmp.eq.s32.totalorder %s28, 1
    %p371 = por %p369, %p370
    %p373 = scmp.ne.s32.totalorder %s358, %s372
    %p374 = scmp.eq.s32.totalorder %s28, 0
    %p375 = por %p373, %p374
    %p376 = scmp.le.s32.totalorder 1, %s22
    %p377 = scmp.lt.s32.totalorder %s22, 3
    %p378 = pnand %p376, %p377
    %p379 = pneg %p378
    // Predicated region
    $region9: #{context_forward.3} parent=5 // pred_check
      _
    $region10: #{context_forward.3} parent=5 // pred_check_branch
      %381 = sbr.rel (%p378) target = $region12
    $region11: #{context_forward.3} parent=5 // pred_region
      %s382 = ssub.s32 %s22, 1
      // Predicated region
      $region13: #{context_forward.3} parent=11 // pred_check
        %p383 = pneg %p95
      $region14: #{context_forward.3} parent=11 // pred_check_branch
        %385 = sbr.rel (%p383) target = $region16
      $region15: #{context_forward.3} parent=11 // pred_region
        _
      $region16: #{context_forward.3} parent=11 // pred_fallthru
        _
      // Predicated region
      $region17: #{context_forward.3} parent=11 // pred_check
        %p386 = pneg %p116
      $region18: #{context_forward.3} parent=11 // pred_check_branch
        %388 = sbr.rel (%p386) target = $region20
      $region19: #{context_forward.3} parent=11 // pred_region
        _
      $region20: #{context_forward.3} parent=11 // pred_fallthru
        _
      // Predicated region
      $region21: #{context_forward.3} parent=11 // pred_check
        %p389 = pneg %p137
      $region22: #{context_forward.3} parent=11 // pred_check_branch
        %391 = sbr.rel (%p389) target = $region24
      $region23: #{context_forward.3} parent=11 // pred_region
        _
      $region24: #{context_forward.3} parent=11 // pred_fallthru
        _
      // Predicated region
      $region25: #{context_forward.3} parent=11 // pred_check
        %p392 = pneg %p158
      $region26: #{context_forward.3} parent=11 // pred_check_branch
        %394 = sbr.rel (%p392) target = $region28
      $region27: #{context_forward.3} parent=11 // pred_region
        _
      $region28: #{context_forward.3} parent=11 // pred_fallthru
        _
      // Predicated region
      $region29: #{context_forward.3} parent=11 // pred_check
        %p395 = pneg %p179
      $region30: #{context_forward.3} parent=11 // pred_check_branch
        %397 = sbr.rel (%p395) target = $region32
      $region31: #{context_forward.3} parent=11 // pred_region
        _
      $region32: #{context_forward.3} parent=11 // pred_fallthru
        _
      // Predicated region
      $region33: #{context_forward.3} parent=11 // pred_check
        %p398 = pneg %p200
      $region34: #{context_forward.3} parent=11 // pred_check_branch
        %400 = sbr.rel (%p398) target = $region36
      $region35: #{context_forward.3} parent=11 // pred_region
        _
      $region36: #{context_forward.3} parent=11 // pred_fallthru
        _
      // Predicated region
      $region37: #{context_forward.3} parent=11 // pred_check
        %p401 = pneg %p221
      $region38: #{context_forward.3} parent=11 // pred_check_branch
        %403 = sbr.rel (%p401) target = $region40
      $region39: #{context_forward.3} parent=11 // pred_region
        _
      $region40: #{context_forward.3} parent=11 // pred_fallthru
        _
      // Predicated region
      $region41: #{context_forward.3} parent=11 // pred_check
        %p404 = pneg %p242
      $region42: #{context_forward.3} parent=11 // pred_check_branch
        %406 = sbr.rel (%p404) target = $region44
      $region43: #{context_forward.3} parent=11 // pred_region
        _
      $region44: #{context_forward.3} parent=11 // pred_fallthru
        _
      // Predicated region
      $region45: #{context_forward.3} parent=11 // pred_check
        %p407 = pneg %p263
      $region46: #{context_forward.3} parent=11 // pred_check_branch
        %409 = sbr.rel (%p407) target = $region48
      $region47: #{context_forward.3} parent=11 // pred_region
        _
      $region48: #{context_forward.3} parent=11 // pred_fallthru
        _
      // Predicated region
      $region49: #{context_forward.3} parent=11 // pred_check
        %p410 = pneg %p284
      $region50: #{context_forward.3} parent=11 // pred_check_branch
        %412 = sbr.rel (%p410) target = $region52
      $region51: #{context_forward.3} parent=11 // pred_region
        _
      $region52: #{context_forward.3} parent=11 // pred_fallthru
        _
      // Predicated region
      $region53: #{context_forward.3} parent=11 // pred_check
        %p413 = pneg %p305
      $region54: #{context_forward.3} parent=11 // pred_check_branch
        %415 = sbr.rel (%p413) target = $region56
      $region55: #{context_forward.3} parent=11 // pred_region
        _
      $region56: #{context_forward.3} parent=11 // pred_fallthru
        _
      // Predicated region
      $region57: #{context_forward.3} parent=11 // pred_check
        %p416 = pneg %p326
      $region58: #{context_forward.3} parent=11 // pred_check_branch
        %418 = sbr.rel (%p416) target = $region60
      $region59: #{context_forward.3} parent=11 // pred_region
        _
      $region60: #{context_forward.3} parent=11 // pred_fallthru
        _
    $region12: #{context_forward.3} parent=5 // pred_fallthru
      _
    %p419 = scmp.lt.s32.totalorder %s22, 2
    // Predicated region
    $region61: #{context_forward.3} parent=5 // pred_check
      %p420 = pneg %p419
    $region62: #{context_forward.3} parent=5 // pred_check_branch
      %422 = sbr.rel (%p420) target = $region64
    $region63: #{context_forward.3} parent=5 // pred_region
      // Predicated region
      $region65: #{context_forward.3} parent=63 // pred_check
        %p423 = pneg %p42
      $region66: #{context_forward.3} parent=63 // pred_check_branch
        %425 = sbr.rel (%p423) target = $region68
      $region67: #{context_forward.3} parent=63 // pred_region
        %s426 = smul.u32 2, %s22
        %p427 = scmp.lt.s32.totalorder %s426, 3
        %s428 = scalar_select %p427, %s426, 3
        %s429 = scalar_lea.vmem %s0, %s428
        %s430 = smul.u32 2, %s22
      $region68: #{context_forward.3} parent=63 // pred_fallthru
        _
      // Predicated region
      $region69: #{context_forward.3} parent=63 // pred_check
        %p431 = pneg %p68
      $region70: #{context_forward.3} parent=63 // pred_check_branch
        %433 = sbr.rel (%p431) target = $region72
      $region71: #{context_forward.3} parent=63 // pred_region
        %s434 = smul.u32 32, %s22
        %p435 = scmp.lt.s32.totalorder %s434, 63
        %s436 = scalar_select %p435, %s434, 63
        %s437 = smul.addr %s436, 8
        %s438 = scalar_lea.vmem %s1, %s437
        %s439 = smul.u32 32, %s22
      $region72: #{context_forward.3} parent=63 // pred_fallthru
        _
    $region64: #{context_forward.3} parent=5 // pred_fallthru
      _
    %p440 = scmp.le.s32.totalorder 1, %s22
    %p441 = scmp.lt.s32.totalorder %s22, 3
    %p442 = pnand %p440, %p441
    %p443 = pneg %p442
    // Predicated region
    $region73: #{context_forward.3} parent=5 // pred_check
      _
    $region74: #{context_forward.3} parent=5 // pred_check_branch
      %445 = sbr.rel (%p442) target = $region76
    $region75: #{context_forward.3} parent=5 // pred_region
      %s446 = ssub.s32 %s22, 1
      %s447 = smul.u32 2, %s27
      %p448 = scmp.lt.s32.totalorder %s447, 3
      %s449 = scalar_select %p448, %s447, 3
      %s450 = scalar_lea.vmem %s0, %s449
      %p451 = pneg %p48
      %p452 = pneg %p45
      %s453 = smul.u32 32, %s27
      %p454 = scmp.lt.s32.totalorder %s453, 63
      %s455 = scalar_select %p454, %s453, 63
      %s456 = smul.addr %s455, 8
      %s457 = scalar_lea.vmem %s1, %s456
      %p458 = pneg %p74
      %p459 = pneg %p71
      %p460 = pneg %p95
      %p461 = pneg %p92
      %p462 = pneg %p116
      %p463 = pneg %p113
      %p464 = pneg %p137
      %p465 = pneg %p134
      %p466 = pneg %p158
      %p467 = pneg %p155
      %p468 = pneg %p179
      %p469 = pneg %p176
      %p470 = pneg %p200
      %p471 = pneg %p197
      %p472 = pneg %p221
      %p473 = pneg %p218
      %p474 = pneg %p242
      %p475 = pneg %p239
      %p476 = pneg %p263
      %p477 = pneg %p260
      %p478 = pneg %p284
      %p479 = pneg %p281
      %p480 = pneg %p305
      %p481 = pneg %p302
      %p482 = pneg %p326
      %p483 = pneg %p323
      %p484 = pneg %p347
      %p485 = pneg %p344
      %p486 = pneg %p368
      %p487 = pneg %p365
      %s488 = smul.u32 2, %s27
      %p489 = scmp.lt.s32.totalorder %s488, 3
      %s490 = scalar_select %p489, %s488, 3
      %s491 = scalar_lea.vmem %s0, %s490
      %s492 = smul.u32 2, %s27
      %s493 = smul.u32 32, %s27
      %p494 = scmp.lt.s32.totalorder %s493, 63
      %s495 = scalar_select %p494, %s493, 63
      %s496 = smul.addr %s495, 8
      %s497 = scalar_lea.vmem %s1, %s496
      %s498 = smul.u32 32, %s27
      %p499 = scmp.eq.s32.totalorder %s27, 0
      // Predicated region
      $region77: #{context_forward.3} parent=75 // pred_check
        %p500 = pneg %p499
      $region78: #{context_forward.3} parent=75 // pred_check_branch
        %502 = sbr.rel (%p500) target = $region80
      $region79: #{context_forward.3} parent=75 // pred_region
        %503 = vst [vmem:[#allocation2] sm:$0xf] 0.0
        %vm504 = vcmask 3072
        %505 = vst.msk [vmem:[#allocation3] sm:$0xf] %vm504, 0.0
      $region80: #{context_forward.3} parent=75 // pred_fallthru
        _
      %v506 = vld [vmem:[%s491] sm:$0x3]
      %v507 = vlaneseq
      %v508 = vshrl.u32 %v507, 7
      %v509 = vperm.slane %v506, 0
      %v510 = vperm.slane %v506, 1
      %vm511 = vcmp.eq.s32.totalorder %v509, %v508
      %vm512 = vcmp.eq.s32.totalorder %v510, %v508
      %v513 = vsel %vm511, 1, 0
      %v514 = vsel %vm512, 1, 0
      %v515 = vcvt.s32.f32 %v513
      %v516 = vcvt.s32.f32 %v514
      %v517 = vld [vmem:[%s497] sm:$0xff]
      %v518 = vld [vmem:[%s497 + $0x8] sm:$0xff]
      %v519 = vld [vmem:[%s497 + $0x10] sm:$0xff]
      %v520 = vld [vmem:[%s497 + $0x18] sm:$0xff]
      %v521 = vld [vmem:[%s497 + $0x20] sm:$0xff]
      %v522 = vld [vmem:[%s497 + $0x28] sm:$0xff]
      %v523 = vld [vmem:[%s497 + $0x30] sm:$0xff]
      %v524 = vld [vmem:[%s497 + $0x38] sm:$0xff]
      %v525 = vld [vmem:[%s497 + $0x40] sm:$0xff]
      %v526 = vld [vmem:[%s497 + $0x48] sm:$0xff]
      %v527 = vld [vmem:[%s497 + $0x50] sm:$0xff]
      %v528 = vld [vmem:[%s497 + $0x58] sm:$0xff]
      %v529 = vld [vmem:[%s497 + $0x60] sm:$0xff]
      %v530 = vld [vmem:[%s497 + $0x68] sm:$0xff]
      %v531 = vld [vmem:[%s497 + $0x70] sm:$0xff]
      %v532 = vld [vmem:[%s497 + $0x78] sm:$0xff]
      %v533 = vld [vmem:[%s497 + $0x80] sm:$0xff]
      %v534 = vld [vmem:[%s497 + $0x88] sm:$0xff]
      %v535 = vld [vmem:[%s497 + $0x90] sm:$0xff]
      %v536 = vld [vmem:[%s497 + $0x98] sm:$0xff]
      %v537 = vld [vmem:[%s497 + $0xa0] sm:$0xff]
      %v538 = vld [vmem:[%s497 + $0xa8] sm:$0xff]
      %v539 = vld [vmem:[%s497 + $0xb0] sm:$0xff]
      %v540 = vld [vmem:[%s497 + $0xb8] sm:$0xff]
      %v541 = vld [vmem:[%s497 + $0xc0] sm:$0xff]
      %v542 = vld [vmem:[%s497 + $0xc8] sm:$0xff]
      %v543 = vld [vmem:[%s497 + $0xd0] sm:$0xff]
      %v544 = vld [vmem:[%s497 + $0xd8] sm:$0xff]
      %v545 = vld [vmem:[%s497 + $0xe0] sm:$0xff]
      %v546 = vld [vmem:[%s497 + $0xe8] sm:$0xff]
      %v547 = vld [vmem:[%s497 + $0xf0] sm:$0xff]
      %v548 = vld [vmem:[%s497 + $0xf8] sm:$0xff]
      %v549 = vld [vmem:[#allocation2] sm:$0xf]
      %550 = vmatpush.msra.mxu0 %v532
      %551 = vmatpush.msra.mxu0 %v531
      %552 = vmatpush.msra.mxu0 %v530
      %553 = vmatpush.msra.mxu0 %v529
      %554 = vmatpush.msra.mxu0 %v528
      %555 = vmatpush.msra.mxu0 %v527
      %556 = vmatpush.msra.mxu0 %v526
      %557 = vmatpush.msra.mxu0 %v525
      %558 = vmatpush.msra.mxu0 %v524
      %559 = vmatpush.msra.mxu0 %v523
      %560 = vmatpush.msra.mxu0 %v522
      %561 = vmatpush.msra.mxu0 %v521
      %562 = vmatpush.msra.mxu0 %v520
      %563 = vmatpush.msra.mxu0 %v519
      %564 = vmatpush.msra.mxu0 %v518
      %565 = vmatpush.msra.mxu0 %v517
      %566 = vmatmul.f32.gmra.mxu0 %v515
      %v567 = vpop.f32.mrf.mxu0
      %v568 = vadd.f32 0.0, %v567
      %569 = vdwg.mxu0
      %570 = vmatpush.msra.mxu0 %v548
      %571 = vmatpush.msra.mxu0 %v547
      %572 = vmatpush.msra.mxu0 %v546
      %573 = vmatpush.msra.mxu0 %v545
      %574 = vmatpush.msra.mxu0 %v544
      %575 = vmatpush.msra.mxu0 %v543
      %576 = vmatpush.msra.mxu0 %v542
      %577 = vmatpush.msra.mxu0 %v541
      %578 = vmatpush.msra.mxu0 %v540
      %579 = vmatpush.msra.mxu0 %v539
      %580 = vmatpush.msra.mxu0 %v538
      %581 = vmatpush.msra.mxu0 %v537
      %582 = vmatpush.msra.mxu0 %v536
      %583 = vmatpush.msra.mxu0 %v535
      %584 = vmatpush.msra.mxu0 %v534
      %585 = vmatpush.msra.mxu0 %v533
      %586 = vmatmul.f32.gmra.mxu0 %v516
      %v587 = vpop.f32.mrf.mxu0
      %v588 = vadd.f32 %v568, %v587
      %589 = vdwg.mxu0
      %v590 = vadd.f32 %v549, %v588
      %591 = vst [vmem:[#allocation2] sm:$0xf] %v590
      %v592 = vld [vmem:[#allocation3] sm:$0xf]
      %vm593 = vcmask 1043456
      %v594 = vsel %vm593, %v515, 0.0
      %v595 = vsel %vm593, %v516, 0.0
      %v596 = vadd.f32 %v594, %v595
      %597 = vadd.xlane.f32.xlu0 %v596
      %v598 = vpop.xlane.xlu0 %597
      %v599 = vadd.f32 %v592, %v598
      %vm600 = vcmask 3072
      %601 = vst.msk [vmem:[#allocation3] sm:$0xf] %vm600, %v599
      %p602 = scmp.eq.s32.totalorder %s27, 1
      // Predicated region
      $region81: #{context_forward.3} parent=75 // pred_check
        %p603 = pneg %p602
      $region82: #{context_forward.3} parent=75 // pred_check_branch
        %605 = sbr.rel (%p603) target = $region84
      $region83: #{context_forward.3} parent=75 // pred_region
        %v606 = vld [vmem:[#allocation2] sm:$0xf]
        %v607 = vld [vmem:[#allocation3] sm:$0xf]
        %v608 = vmax.f32 %v607, 1.0
        %610 = vset.pattern.permute.xlu0 0
        %611 = vperm.xlu0 %610, %v608
        %v612 = vpop.permute.xlu0 %611
        %v614 = vrcp.pop %v612
        %v615 = vmul.f32 %v612, %v614
        %v616 = vsub.f32 1.0, %v615
        %v617 = vmul.f32 %v614, %v616
        %v618 = vadd.f32 %v614, %v617
        %vm619 = vweird.f32 %v612
        %vm620 = vweird.f32 %v614
        %vm621 = vmor %vm619, %vm620
        %v622 = vsel %vm621, %v614, %v618
        %v623 = vand.u32 2147483647, %v612
        %vm624 = vcmp.eq.f32.partialorder %v623, 8.507059e+37
        %v625 = vand.u32 %v612, 2147483648
        %v626 = vor.u32 1.1754944e-38, %v625
        %v627 = vsel %vm624, %v626, %v622
        %v628 = vmul.f32 %v606, %v627
        %v629 = vld [vmem:[%s2] sm:$0xff]
        %v630 = vld [vmem:[%s2 + $0x8] sm:$0xff]
        %v631 = vld [vmem:[%s2 + $0x10] sm:$0xff]
        %v632 = vld [vmem:[%s2 + $0x18] sm:$0xff]
        %v633 = vld [vmem:[%s2 + $0x20] sm:$0xff]
        %v634 = vld [vmem:[%s2 + $0x28] sm:$0xff]
        %v635 = vld [vmem:[%s2 + $0x30] sm:$0xff]
        %v636 = vld [vmem:[%s2 + $0x38] sm:$0xff]
        %v637 = vld [vmem:[%s2 + $0x40] sm:$0xff]
        %v638 = vld [vmem:[%s2 + $0x48] sm:$0xff]
        %v639 = vld [vmem:[%s2 + $0x50] sm:$0xff]
        %v640 = vld [vmem:[%s2 + $0x58] sm:$0xff]
        %v641 = vld [vmem:[%s2 + $0x60] sm:$0xff]
        %v642 = vld [vmem:[%s2 + $0x68] sm:$0xff]
        %v643 = vld [vmem:[%s2 + $0x70] sm:$0xff]
        %v644 = vld [vmem:[%s2 + $0x78] sm:$0xff]
        %v645 = vld [vmem:[%s3] sm:$0x1]
        %v647 = vperm.slane %v645, 0
        %649 = vmatpush.msra.mxu0 %v644
        %650 = vmatpush.msra.mxu0 %v643
        %651 = vmatpush.msra.mxu0 %v642
        %652 = vmatpush.msra.mxu0 %v641
        %653 = vmatpush.msra.mxu0 %v640
        %654 = vmatpush.msra.mxu0 %v639
        %655 = vmatpush.msra.mxu0 %v638
        %656 = vmatpush.msra.mxu0 %v637
        %657 = vmatpush.msra.mxu0 %v636
        %658 = vmatpush.msra.mxu0 %v635
        %659 = vmatpush.msra.mxu0 %v634
        %660 = vmatpush.msra.mxu0 %v633
        %661 = vmatpush.msra.mxu0 %v632
        %662 = vmatpush.msra.mxu0 %v631
        %663 = vmatpush.msra.mxu0 %v630
        %664 = vmatpush.msra.mxu0 %v629
        %665 = vmatmul.f32.gmra.mxu0 %v628
        %v666 = vpop.f32.mrf.mxu0
        %v667 = vadd.f32 %v647, %v666
        %668 = vdwg.mxu0
        %v669 = vmax.f32 %v667, 0.0
        %v670 = vld [vmem:[%s4] sm:$0xff]
        %v671 = vld [vmem:[%s4 + $0x8] sm:$0xff]
        %v672 = vld [vmem:[%s4 + $0x10] sm:$0xff]
        %v673 = vld [vmem:[%s4 + $0x18] sm:$0xff]
        %v674 = vld [vmem:[%s4 + $0x20] sm:$0xff]
        %v675 = vld [vmem:[%s4 + $0x28] sm:$0xff]
        %v676 = vld [vmem:[%s4 + $0x30] sm:$0xff]
        %v677 = vld [vmem:[%s4 + $0x38] sm:$0xff]
        %v678 = vld [vmem:[%s4 + $0x40] sm:$0xff]
        %v679 = vld [vmem:[%s4 + $0x48] sm:$0xff]
        %v680 = vld [vmem:[%s4 + $0x50] sm:$0xff]
        %v681 = vld [vmem:[%s4 + $0x58] sm:$0xff]
        %v682 = vld [vmem:[%s4 + $0x60] sm:$0xff]
        %v683 = vld [vmem:[%s4 + $0x68] sm:$0xff]
        %v684 = vld [vmem:[%s4 + $0x70] sm:$0xff]
        %v685 = vld [vmem:[%s4 + $0x78] sm:$0xff]
        %v686 = vld [vmem:[%s5] sm:$0x1]
        %v688 = vperm.slane %v686, 0
        %690 = vmatpush.msra.mxu0 %v685
        %691 = vmatpush.msra.mxu0 %v684
        %692 = vmatpush.msra.mxu0 %v683
        %693 = vmatpush.msra.mxu0 %v682
        %694 = vmatpush.msra.mxu0 %v681
        %695 = vmatpush.msra.mxu0 %v680
        %696 = vmatpush.msra.mxu0 %v679
        %697 = vmatpush.msra.mxu0 %v678
        %698 = vmatpush.msra.mxu0 %v677
        %699 = vmatpush.msra.mxu0 %v676
        %700 = vmatpush.msra.mxu0 %v675
        %701 = vmatpush.msra.mxu0 %v674
        %702 = vmatpush.msra.mxu0 %v673
        %703 = vmatpush.msra.mxu0 %v672
        %704 = vmatpush.msra.mxu0 %v671
        %705 = vmatpush.msra.mxu0 %v670
        %706 = vmatmul.f32.gmra.mxu0 %v669
        %v707 = vpop.f32.mrf.mxu0
        %v708 = vadd.f32 %v688, %v707
        %709 = vdwg.mxu0
        %v710 = vmax.f32 %v708, 0.0
        %v711 = vld [vmem:[%s6] sm:$0xff]
        %v712 = vld [vmem:[%s6 + $0x8] sm:$0xff]
        %v713 = vld [vmem:[%s6 + $0x10] sm:$0xff]
        %v714 = vld [vmem:[%s6 + $0x18] sm:$0xff]
        %v715 = vld [vmem:[%s6 + $0x20] sm:$0xff]
        %v716 = vld [vmem:[%s6 + $0x28] sm:$0xff]
        %v717 = vld [vmem:[%s6 + $0x30] sm:$0xff]
        %v718 = vld [vmem:[%s6 + $0x38] sm:$0xff]
        %v719 = vld [vmem:[%s6 + $0x40] sm:$0xff]
        %v720 = vld [vmem:[%s6 + $0x48] sm:$0xff]
        %v721 = vld [vmem:[%s6 + $0x50] sm:$0xff]
        %v722 = vld [vmem:[%s6 + $0x58] sm:$0xff]
        %v723 = vld [vmem:[%s6 + $0x60] sm:$0xff]
        %v724 = vld [vmem:[%s6 + $0x68] sm:$0xff]
        %v725 = vld [vmem:[%s6 + $0x70] sm:$0xff]
        %v726 = vld [vmem:[%s6 + $0x78] sm:$0xff]
        %v727 = vld [vmem:[%s7] sm:$0x1]
        %v729 = vperm.slane %v727, 0
        %731 = vmatpush.msra.mxu0 %v726
        %732 = vmatpush.msra.mxu0 %v725
        %733 = vmatpush.msra.mxu0 %v724
        %734 = vmatpush.msra.mxu0 %v723
        %735 = vmatpush.msra.mxu0 %v722
        %736 = vmatpush.msra.mxu0 %v721
        %737 = vmatpush.msra.mxu0 %v720
        %738 = vmatpush.msra.mxu0 %v719
        %739 = vmatpush.msra.mxu0 %v718
        %740 = vmatpush.msra.mxu0 %v717
        %741 = vmatpush.msra.mxu0 %v716
        %742 = vmatpush.msra.mxu0 %v715
        %743 = vmatpush.msra.mxu0 %v714
        %744 = vmatpush.msra.mxu0 %v713
        %745 = vmatpush.msra.mxu0 %v712
        %746 = vmatpush.msra.mxu0 %v711
        %747 = vmatmul.f32.gmra.mxu0 %v710
        %v748 = vpop.f32.mrf.mxu0
        %v749 = vadd.f32 %v729, %v748
        %750 = vdwg.mxu0
        %v751 = vxor.u32 %v749, 2147483648
        %v752 = vmul.f32 %v751, 1.442695
        %v753 = vpow.pop %v752
        %v754 = vadd.f32 %v753, 1.0
        %v755 = vrcp.pop %v754
        %v756 = vmul.f32 %v754, %v755
        %v757 = vsub.f32 1.0, %v756
        %v758 = vmul.f32 %v755, %v757
        %v759 = vadd.f32 %v755, %v758
        %vm760 = vweird.f32 %v754
        %vm761 = vweird.f32 %v755
        %vm762 = vmor %vm760, %vm761
        %v763 = vsel %vm762, %v755, %v759
        %v764 = vand.u32 2147483647, %v754
        %vm765 = vcmp.eq.f32.partialorder %v764, 8.507059e+37
        %v766 = vand.u32 %v754, 2147483648
        %v767 = vor.u32 1.1754944e-38, %v766
        %v768 = vsel %vm765, %v767, %v763
        %v769 = vmul.f32 1.0, %v768
        %v770 = vmul.f32 %v628, %v769
        %v771 = vld [vmem:[%s8] sm:$0xff]
        %v772 = vld [vmem:[%s8 + $0x8] sm:$0xff]
        %v773 = vld [vmem:[%s8 + $0x10] sm:$0xff]
        %v774 = vld [vmem:[%s8 + $0x18] sm:$0xff]
        %v775 = vld [vmem:[%s8 + $0x20] sm:$0xff]
        %v776 = vld [vmem:[%s8 + $0x28] sm:$0xff]
        %v777 = vld [vmem:[%s8 + $0x30] sm:$0xff]
        %v778 = vld [vmem:[%s8 + $0x38] sm:$0xff]
        %v779 = vld [vmem:[%s8 + $0x40] sm:$0xff]
        %v780 = vld [vmem:[%s8 + $0x48] sm:$0xff]
        %v781 = vld [vmem:[%s8 + $0x50] sm:$0xff]
        %v782 = vld [vmem:[%s8 + $0x58] sm:$0xff]
        %v783 = vld [vmem:[%s8 + $0x60] sm:$0xff]
        %v784 = vld [vmem:[%s8 + $0x68] sm:$0xff]
        %v785 = vld [vmem:[%s8 + $0x70] sm:$0xff]
        %v786 = vld [vmem:[%s8 + $0x78] sm:$0xff]
        %v787 = vld [vmem:[%s9] sm:$0x1]
        %v789 = vperm.slane %v787, 0
        %791 = vmatpush.msra.mxu0 %v786
        %792 = vmatpush.msra.mxu0 %v785
        %793 = vmatpush.msra.mxu0 %v784
        %794 = vmatpush.msra.mxu0 %v783
        %795 = vmatpush.msra.mxu0 %v782
        %796 = vmatpush.msra.mxu0 %v781
        %797 = vmatpush.msra.mxu0 %v780
        %798 = vmatpush.msra.mxu0 %v779
        %799 = vmatpush.msra.mxu0 %v778
        %800 = vmatpush.msra.mxu0 %v777
        %801 = vmatpush.msra.mxu0 %v776
        %802 = vmatpush.msra.mxu0 %v775
        %803 = vmatpush.msra.mxu0 %v774
        %804 = vmatpush.msra.mxu0 %v773
        %805 = vmatpush.msra.mxu0 %v772
        %806 = vmatpush.msra.mxu0 %v771
        %807 = vmatmul.f32.gmra.mxu0 %v770
        %v808 = vpop.f32.mrf.mxu0
        %v809 = vadd.f32 %v789, %v808
        %810 = vdwg.mxu0
        %v811 = vmax.f32 %v809, 0.0
        %v812 = vld [vmem:[%s10] sm:$0xff]
        %v813 = vld [vmem:[%s10 + $0x8] sm:$0xff]
        %v814 = vld [vmem:[%s10 + $0x10] sm:$0xff]
        %v815 = vld [vmem:[%s10 + $0x18] sm:$0xff]
        %v816 = vld [vmem:[%s10 + $0x20] sm:$0xff]
        %v817 = vld [vmem:[%s10 + $0x28] sm:$0xff]
        %v818 = vld [vmem:[%s10 + $0x30] sm:$0xff]
        %v819 = vld [vmem:[%s10 + $0x38] sm:$0xff]
        %v820 = vld [vmem:[%s10 + $0x40] sm:$0xff]
        %v821 = vld [vmem:[%s10 + $0x48] sm:$0xff]
        %v822 = vld [vmem:[%s10 + $0x50] sm:$0xff]
        %v823 = vld [vmem:[%s10 + $0x58] sm:$0xff]
        %v824 = vld [vmem:[%s10 + $0x60] sm:$0xff]
        %v825 = vld [vmem:[%s10 + $0x68] sm:$0xff]
        %v826 = vld [vmem:[%s10 + $0x70] sm:$0xff]
        %v827 = vld [vmem:[%s10 + $0x78] sm:$0xff]
        %v828 = vld [vmem:[%s11] sm:$0x1]
        %v830 = vperm.slane %v828, 0
        %832 = vmatpush.msra.mxu0 %v827
        %833 = vmatpush.msra.mxu0 %v826
        %834 = vmatpush.msra.mxu0 %v825
        %835 = vmatpush.msra.mxu0 %v824
        %836 = vmatpush.msra.mxu0 %v823
        %837 = vmatpush.msra.mxu0 %v822
        %838 = vmatpush.msra.mxu0 %v821
        %839 = vmatpush.msra.mxu0 %v820
        %840 = vmatpush.msra.mxu0 %v819
        %841 = vmatpush.msra.mxu0 %v818
        %842 = vmatpush.msra.mxu0 %v817
        %843 = vmatpush.msra.mxu0 %v816
        %844 = vmatpush.msra.mxu0 %v815
        %845 = vmatpush.msra.mxu0 %v814
        %846 = vmatpush.msra.mxu0 %v813
        %847 = vmatpush.msra.mxu0 %v812
        %848 = vmatmul.f32.gmra.mxu0 %v811
        %v849 = vpop.f32.mrf.mxu0
        %v850 = vadd.f32 %v830, %v849
        %851 = vdwg.mxu0
        %v852 = vmax.f32 %v850, 0.0
        %v853 = vld [vmem:[%s12] sm:$0xff]
        %v854 = vld [vmem:[%s12 + $0x8] sm:$0xff]
        %v855 = vld [vmem:[%s12 + $0x10] sm:$0xff]
        %v856 = vld [vmem:[%s12 + $0x18] sm:$0xff]
        %v857 = vld [vmem:[%s12 + $0x20] sm:$0xff]
        %v858 = vld [vmem:[%s12 + $0x28] sm:$0xff]
        %v859 = vld [vmem:[%s12 + $0x30] sm:$0xff]
        %v860 = vld [vmem:[%s12 + $0x38] sm:$0xff]
        %v861 = vld [vmem:[%s12 + $0x40] sm:$0xff]
        %v862 = vld [vmem:[%s12 + $0x48] sm:$0xff]
        %v863 = vld [vmem:[%s12 + $0x50] sm:$0xff]
        %v864 = vld [vmem:[%s12 + $0x58] sm:$0xff]
        %v865 = vld [vmem:[%s12 + $0x60] sm:$0xff]
        %v866 = vld [vmem:[%s12 + $0x68] sm:$0xff]
        %v867 = vld [vmem:[%s12 + $0x70] sm:$0xff]
        %v868 = vld [vmem:[%s12 + $0x78] sm:$0xff]
        %v869 = vld [vmem:[%s13] sm:$0x1]
        %v871 = vperm.slane %v869, 0
        %873 = vmatpush.msra.mxu0 %v868
        %874 = vmatpush.msra.mxu0 %v867
        %875 = vmatpush.msra.mxu0 %v866
        %876 = vmatpush.msra.mxu0 %v865
        %877 = vmatpush.msra.mxu0 %v864
        %878 = vmatpush.msra.mxu0 %v863
        %879 = vmatpush.msra.mxu0 %v862
        %880 = vmatpush.msra.mxu0 %v861
        %881 = vmatpush.msra.mxu0 %v860
        %882 = vmatpush.msra.mxu0 %v859
        %883 = vmatpush.msra.mxu0 %v858
        %884 = vmatpush.msra.mxu0 %v857
        %885 = vmatpush.msra.mxu0 %v856
        %886 = vmatpush.msra.mxu0 %v855
        %887 = vmatpush.msra.mxu0 %v854
        %888 = vmatpush.msra.mxu0 %v853
        %889 = vmatmul.f32.gmra.mxu0 %v852
        %v890 = vpop.f32.mrf.mxu0
        %v891 = vadd.f32 %v871, %v890
        %892 = vdwg.mxu0
        %v893 = vxor.u32 %v891, 2147483648
        %v894 = vmul.f32 %v893, 1.442695
        %v895 = vpow.pop %v894
        %v896 = vadd.f32 %v895, 1.0
        %v897 = vrcp.pop %v896
        %v898 = vmul.f32 %v896, %v897
        %v899 = vsub.f32 1.0, %v898
        %v900 = vmul.f32 %v897, %v899
        %v901 = vadd.f32 %v897, %v900
        %vm902 = vweird.f32 %v896
        %vm903 = vweird.f32 %v897
        %vm904 = vmor %vm902, %vm903
        %v905 = vsel %vm904, %v897, %v901
        %v906 = vand.u32 2147483647, %v896
        %vm907 = vcmp.eq.f32.partialorder %v906, 8.507059e+37
        %v908 = vand.u32 %v896, 2147483648
        %v909 = vor.u32 1.1754944e-38, %v908
        %v910 = vsel %vm907, %v909, %v905
        %v911 = vmul.f32 1.0, %v910
        %912 = vst [vmem:[%s14] sm:$0xf] %v769
        %913 = vst [vmem:[%s15] sm:$0xf] %v911
      $region84: #{context_forward.3} parent=75 // pred_fallthru
        _
      // Predicated region
      $region85: #{context_forward.3} parent=75 // pred_check
        %p914 = pneg %p344
      $region86: #{context_forward.3} parent=75 // pred_check_branch
        %916 = sbr.rel (%p914) target = $region88
      $region87: #{context_forward.3} parent=75 // pred_region
        _
      $region88: #{context_forward.3} parent=75 // pred_fallthru
        _
      // Predicated region
      $region89: #{context_forward.3} parent=75 // pred_check
        %p917 = pneg %p365
      $region90: #{context_forward.3} parent=75 // pred_check_branch
        %919 = sbr.rel (%p917) target = $region92
      $region91: #{context_forward.3} parent=75 // pred_region
        _
      $region92: #{context_forward.3} parent=75 // pred_fallthru
        _
      // Predicated region
      $region93: #{context_forward.3} parent=75 // pred_check
        %p920 = pneg %p344
      $region94: #{context_forward.3} parent=75 // pred_check_branch
        %922 = sbr.rel (%p920) target = $region96
      $region95: #{context_forward.3} parent=75 // pred_region
        _
      $region96: #{context_forward.3} parent=75 // pred_fallthru
        _
      // Predicated region
      $region97: #{context_forward.3} parent=75 // pred_check
        %p923 = pneg %p365
      $region98: #{context_forward.3} parent=75 // pred_check_branch
        %925 = sbr.rel (%p923) target = $region100
      $region99: #{context_forward.3} parent=75 // pred_region
        _
      $region100: #{context_forward.3} parent=75 // pred_fallthru
        _
    $region76: #{context_forward.3} parent=5 // pred_fallthru
      _
    %p926 = scmp.le.s32.totalorder 2, %s22
    // Predicated region
    $region101: #{context_forward.3} parent=5 // pred_check
      %p927 = pneg %p926
    $region102: #{context_forward.3} parent=5 // pred_check_branch
      %929 = sbr.rel (%p927) target = $region104
    $region103: #{context_forward.3} parent=5 // pred_region
      %s930 = ssub.s32 %s22, 2
    $region104: #{context_forward.3} parent=5 // pred_fallthru
      _
  $region6: #{context_forward.3} parent=0 // loop_footer
    %s26 = sadd.s32 1, %s22
  $region7: #{context_forward.3} parent=0 // loop_footer_branch
    %21 = sbr.rel target = $region3
  $region8: #{context_forward.3} parent=0 // loop_exit
    _

</llo_original>
